<compile_context>
chip_gen: v7x
topology: tpu7x:2x2x1
jax: 0.10.0
libtpu: 0.0.40
codegen_flags: <defaults>
</compile_context>

<pallas_src>
import functools

import jax
import jax.numpy as jnp
from jax.experimental import pallas as pl
from jax.experimental.pallas import tpu as pltpu


NSPLIT = 2          # second "parallel" grid axis: keeps both v7x TensorCores busy
TILE_N_MAX = 512    # >=256 keeps the 256-tall MXU (v6e/v7x) filled; bounds VMEM


def _cdiv(a, b):
    return (a + b - 1) // b


def _round_up(x, m):
    return _cdiv(x, m) * m


# ----------------------------------------------------------------------------
# Kernel 1: per-tile point MLP (conv1 -> conv2 -> conv3, BN+ReLU folded/fused)
#           with a resident running-max accumulator over the point axis.
# ----------------------------------------------------------------------------
def point_feat_kernel(x_ref, w1_ref, b1_ref, w2_ref, b2_ref, w3_ref, b3_ref,
                      out_ref, acc_ref, *, tile_n, tiles_per_split, n_valid,
                      need_mask):
    t = pl.program_id(2)

    @pl.when(t == 0)
    def _():
        # ReLU guarantees every true activation >= 0, so 0 is a safe identity
        # element for the running max.
        acc_ref[...] = jnp.zeros_like(acc_ref)

    x = x_ref[0]                                          # (tile_n, k) bf16
    h = jnp.dot(x, w1_ref[...], preferred_element_type=jnp.float32)
    h = jnp.maximum(h + b1_ref[...], 0.0)                 # (tile_n, 64)  f32
    h = jnp.dot(h.astype(jnp.bfloat16), w2_ref[...],
                preferred_element_type=jnp.float32)
    h = jnp.maximum(h + b2_ref[...], 0.0)                 # (tile_n, 128) f32
    h = jnp.dot(h.astype(jnp.bfloat16), w3_ref[...],
                preferred_element_type=jnp.float32)
    h = jnp.maximum(h + b3_ref[...], 0.0)                 # (tile_n, 1024) f32

    if need_mask:
        # Zero out rows that come from the zero-padded tail of N.  Safe only
        # because ReLU makes all valid activations >= 0 (so 0 never wins).
        s = pl.program_id(1)
        start = (s * tiles_per_split + t) * tile_n
        rows = start + jax.lax.broadcasted_iota(jnp.int32, (tile_n, 1), 0)
        h = jnp.where(rows < n_valid, h, 0.0)

    acc_ref[...] = jnp.maximum(acc_ref[...],
                               jnp.max(h, axis=0, keepdims=True))

    @pl.when(t == tiles_per_split - 1)
    def _():
        out_ref[0] = acc_ref[...]


def point_features(x_bnk, w1, b1, w2, b2, w3, b3):
    """x_bnk: (B, N, k) f32 -> (B, 1024) global feature (max over points)."""
    B, N, k = x_bnk.shape

    per_split = _cdiv(N, NSPLIT)
    tile_n = min(TILE_N_MAX, _round_up(per_split, 16))
    tiles_per_split = _cdiv(per_split, tile_n)
    n_pad = NSPLIT * tiles_per_split * tile_n
    need_mask = (n_pad != N)

    x = x_bnk.astype(jnp.bfloat16)
    if need_mask:
        x = jnp.pad(x, ((0, 0), (0, n_pad - N), (0, 0)))

    w1b = w1.astype(jnp.bfloat16)
    w2b = w2.astype(jnp.bfloat16)
    w3b = w3.astype(jnp.bfloat16)
    b1r = b1.reshape(1, -1).astype(jnp.float32)
    b2r = b2.reshape(1, -1).astype(jnp.float32)
    b3r = b3.reshape(1, -1).astype(jnp.float32)

    flops = 2 * B * n_pad * (k * 64 + 64 * 128 + 128 * 1024)
    bytes_accessed = (x.size * 2
                      + (w1b.size + w2b.size + w3b.size) * 2
                      + (b1r.size + b2r.size + b3r.size) * 4
                      + B * NSPLIT * 1024 * 4)
    cost = pl.CostEstimate(flops=flops, transcendentals=0,
                           bytes_accessed=bytes_accessed)

    kernel = functools.partial(point_feat_kernel, tile_n=tile_n,
                               tiles_per_split=tiles_per_split, n_valid=N,
                               need_mask=need_mask)

    out = pl.pallas_call(
        kernel,
        out_shape=jax.ShapeDtypeStruct((B * NSPLIT, 1, 1024), jnp.float32),
        grid_spec=pltpu.PrefetchScalarGridSpec(
            num_scalar_prefetch=0,
            grid=(B, NSPLIT, tiles_per_split),
            in_specs=[
                pl.BlockSpec((1, tile_n, k),
                             lambda b, s, t: (b, s * tiles_per_split + t, 0)),
                pl.BlockSpec((k, 64), lambda b, s, t: (0, 0)),
                pl.BlockSpec((1, 64), lambda b, s, t: (0, 0)),
                pl.BlockSpec((64, 128), lambda b, s, t: (0, 0)),
                pl.BlockSpec((1, 128), lambda b, s, t: (0, 0)),
                pl.BlockSpec((128, 1024), lambda b, s, t: (0, 0)),
                pl.BlockSpec((1, 1024), lambda b, s, t: (0, 0)),
            ],
            out_specs=pl.BlockSpec((1, 1, 1024),
                                   lambda b, s, t: (b * NSPLIT + s, 0, 0)),
            scratch_shapes=[pltpu.VMEM((1, 1024), jnp.float32)],
        ),
        compiler_params=pltpu.CompilerParams(
            dimension_semantics=("parallel", "parallel", "arbitrary"),
            vmem_limit_bytes=48 * 1024 * 1024),
        cost_estimate=cost,
    )(x, w1b, b1r, w2b, b2r, w3b, b3r)

    # Combine the per-split partial maxima (tiny).
    return jnp.max(out.reshape(B, NSPLIT, 1024), axis=1)


# ----------------------------------------------------------------------------
# Kernel 2: fc1 -> fc2 (BN+ReLU folded/fused) -> fc3, plus the flattened k x k
#           identity (pre-added into the fc3 bias).
# ----------------------------------------------------------------------------
def head_kernel(f_ref, w4_ref, b4_ref, w5_ref, b5_ref, w6_ref, b6_ref,
                out_ref):
    h = jnp.dot(f_ref[...].astype(jnp.bfloat16), w4_ref[...],
                preferred_element_type=jnp.float32)
    h = jnp.maximum(h + b4_ref[...], 0.0)                 # (B, 512)
    h = jnp.dot(h.astype(jnp.bfloat16), w5_ref[...],
                preferred_element_type=jnp.float32)
    h = jnp.maximum(h + b5_ref[...], 0.0)                 # (B, 256)
    h = jnp.dot(h.astype(jnp.bfloat16), w6_ref[...],
                preferred_element_type=jnp.float32)
    out_ref[...] = h + b6_ref[...]                        # (B, k*k); has iden


def transform_head(feat, w4, b4, w5, b5, w6, b6_plus_iden, k):
    B = feat.shape[0]
    out = pl.pallas_call(
        head_kernel,
        out_shape=jax.ShapeDtypeStruct((B, k * k), jnp.float32),
        in_specs=[pl.BlockSpec(memory_space=pltpu.MemorySpace.VMEM)
                  for _ in range(7)],
        out_specs=pl.BlockSpec(memory_space=pltpu.MemorySpace.VMEM),
    )(feat,
      w4.astype(jnp.bfloat16), b4.reshape(1, -1).astype(jnp.float32),
      w5.astype(jnp.bfloat16), b5.reshape(1, -1).astype(jnp.float32),
      w6.astype(jnp.bfloat16), b6_plus_iden.reshape(1, -1).astype(jnp.float32))
    return out.reshape(B, k, k)


# ----------------------------------------------------------------------------
# Parameter setup (deterministic), BN folding, and full forward.
# ----------------------------------------------------------------------------
def _init_params(key, k):
    dims = [(k, 64), (64, 128), (128, 1024), (1024, 512), (512, 256),
            (256, k * k)]
    params = {}
    keys = jax.random.split(key, 2 * len(dims) + 5)
    kk = 0
    for i, (cin, cout) in enumerate(dims, start=1):
        scale = 1.0 / jnp.sqrt(jnp.float32(cin))
        params[f"w{i}"] = (jax.random.normal(keys[kk], (cin, cout), jnp.float32)
                           * scale)
        kk += 1
        params[f"b{i}"] = (jax.random.normal(keys[kk], (cout,), jnp.float32)
                           * 0.01)
        kk += 1
    # BatchNorm params for layers 1..5 (inference mode, running stats).
    # TODO(synk): training-mode BatchNorm (batch statistics + running-stat
    # updates) is not implemented; inference-mode stats are folded instead.
    bn_dims = [64, 128, 1024, 512, 256]
    for i, c in enumerate(bn_dims, start=1):
        sub = jax.random.split(keys[kk], 4)
        params[f"bn{i}_gamma"] = 1.0 + 0.1 * jax.random.normal(sub[0], (c,),
                                                               jnp.float32)
        params[f"bn{i}_beta"] = 0.1 * jax.random.normal(sub[1], (c,),
                                                        jnp.float32)
        params[f"bn{i}_mean"] = 0.1 * jax.random.normal(sub[2], (c,),
                                                        jnp.float32)
        params[f"bn{i}_var"] = jnp.abs(
            1.0 + 0.1 * jax.random.normal(sub[3], (c,), jnp.float32))
        kk += 1
    return params


def _fold_bn(w, b, gamma, beta, mean, var, eps=1e-5):
    """Fold inference-mode BatchNorm into a (Cin, Cout) weight and bias."""
    s = gamma / jnp.sqrt(var + eps)
    return w * s[None, :], (b - mean) * s + beta


def _folded_weights(params):
    folded = []
    for i in range(1, 6):
        folded.append(_fold_bn(params[f"w{i}"], params[f"b{i}"],
                               params[f"bn{i}_gamma"], params[f"bn{i}_beta"],
                               params[f"bn{i}_mean"], params[f"bn{i}_var"]))
    return folded  # [(w1,b1), ..., (w5,b5)]


def stnkd_forward(x_bkn, params, k):
    """x_bkn: (B, k, N) float32 (PyTorch NCW layout) -> (B, k, k)."""
    x = jnp.transpose(x_bkn, (0, 2, 1)).astype(jnp.float32)   # (B, N, k)

    (w1, b1), (w2, b2), (w3, b3), (w4, b4), (w5, b5) = _folded_weights(params)
    iden = jnp.eye(k, dtype=jnp.float32).reshape(-1)
    b6_plus_iden = params["b6"] + iden

    feat = point_features(x, w1, b1, w2, b2, w3, b3)           # (B, 1024)
    return transform_head(feat, w4, b4, w5, b5, params["w6"], b6_plus_iden, k)


def _reference_forward(x_bkn, params, k):
    """Pure-JAX reference with the same bf16-matmul / f32-accumulate math."""
    x = jnp.transpose(x_bkn, (0, 2, 1)).astype(jnp.float32)
    (w1, b1), (w2, b2), (w3, b3), (w4, b4), (w5, b5) = _folded_weights(params)

    def mm(a, w):
        return jnp.dot(a.astype(jnp.bfloat16), w.astype(jnp.bfloat16),
                       preferred_element_type=jnp.float32)

    h = jax.nn.relu(mm(x, w1) + b1)
    h = jax.nn.relu(mm(h, w2) + b2)
    h = jax.nn.relu(mm(h, w3) + b3)
    f = jnp.max(h, axis=1)
    h = jax.nn.relu(mm(f, w4) + b4)
    h = jax.nn.relu(mm(h, w5) + b5)
    o = mm(h, params["w6"]) + params["b6"]
    o = o + jnp.eye(k, dtype=jnp.float32).reshape(-1)
    return o.reshape(-1, k, k)


if __name__ == "__main__":
    B, N, K = 2, 300, 64          # small: batch of 2 clouds, 300 pts, k=64
    key = jax.random.PRNGKey(0)
    k_x, k_p = jax.random.split(key)
    x = jax.random.normal(k_x, (B, K, N), jnp.float32)   # PyTorch (B, k, N)
    params = _init_params(k_p, K)

    out = jax.block_until_ready(stnkd_forward(x, params, K))
    ref = jax.block_until_ready(_reference_forward(x, params, K))

    assert out.shape == (B, K, K), out.shape
    assert jnp.allclose(out, ref, rtol=5e-3, atol=5e-3), (
        "mismatch vs pure-JAX reference: max abs err = "
        + str(float(jnp.max(jnp.abs(out - ref)))))
    print("KERNEL_OK")
</pallas_src>

<mosaic_0001>
module attributes {stable_mosaic.version = 11 : i64} {
  func.func @point_feat_kernel(%arg0: i32, %arg1: i32, %arg2: i32, %arg3: memref<1x160x64xbf16, #tpu.memory_space<vmem>>, %arg4: memref<64x64xbf16, #tpu.memory_space<vmem>>, %arg5: memref<1x64xf32, #tpu.memory_space<vmem>>, %arg6: memref<64x128xbf16, #tpu.memory_space<vmem>>, %arg7: memref<1x128xf32, #tpu.memory_space<vmem>>, %arg8: memref<128x1024xbf16, #tpu.memory_space<vmem>>, %arg9: memref<1x1024xf32, #tpu.memory_space<vmem>>, %arg10: memref<1x1x1024xf32, #tpu.memory_space<vmem>>, %arg11: memref<1x1024xf32, #tpu.memory_space<vmem>>) attributes {dimension_semantics = [#tpu.dimension_semantics<parallel>, #tpu.dimension_semantics<parallel>, #tpu.dimension_semantics<arbitrary>], iteration_bounds = array<i64: 2, 2, 1>, scalar_prefetch = 0 : i64, scratch_operands = 1 : i64, tpu.core_type = #tpu.core_type<tc>, window_params = [{transform_indices = @transform_0, window_bounds = array<i64: 1, 160, 64>}, {pipeline_mode = #tpu.pipeline_mode<synchronous>, transform_indices = @transform_1, window_bounds = array<i64: 64, 64>}, {pipeline_mode = #tpu.pipeline_mode<synchronous>, transform_indices = @transform_2, window_bounds = array<i64: 1, 64>}, {pipeline_mode = #tpu.pipeline_mode<synchronous>, transform_indices = @transform_3, window_bounds = array<i64: 64, 128>}, {pipeline_mode = #tpu.pipeline_mode<synchronous>, transform_indices = @transform_4, window_bounds = array<i64: 1, 128>}, {pipeline_mode = #tpu.pipeline_mode<synchronous>, transform_indices = @transform_5, window_bounds = array<i64: 128, 1024>}, {pipeline_mode = #tpu.pipeline_mode<synchronous>, transform_indices = @transform_6, window_bounds = array<i64: 1, 1024>}, {transform_indices = @transform_7, window_bounds = array<i64: 1, 1, 1024>}]} {
    %c0_i32 = arith.constant 0 : i32
    %0 = arith.cmpi eq, %arg2, %c0_i32 : i32
    %1 = arith.extui %0 : i1 to i32
    %c0_i32_0 = arith.constant 0 : i32
    %2 = arith.cmpi ne, %1, %c0_i32_0 : i32
    scf.if %2 {
      %cst_28 = arith.constant 0.000000e+00 : f32
      %48 = vector.broadcast %cst_28 : f32 to vector<1x1024xf32>
      %c0_29 = arith.constant 0 : index
      %c0_30 = arith.constant 0 : index
      %49 = vector.load %arg11[%c0_29, %c0_30] : memref<1x1024xf32, #tpu.memory_space<vmem>>, vector<1x1024xf32>
      tpu.vector_store %arg11[%c0_29, %c0_30], %48 {strides = array<i32>} : memref<1x1024xf32, #tpu.memory_space<vmem>>, vector<1x1024xf32>,
    } else {
    }
    %c0 = arith.constant 0 : index
    %c0_1 = arith.constant 0 : index
    %c0_2 = arith.constant 0 : index
    %3 = vector.load %arg3[%c0, %c0_1, %c0_2] : memref<1x160x64xbf16, #tpu.memory_space<vmem>>, vector<1x160x64xbf16>
    %4 = vector.shape_cast %3 : vector<1x160x64xbf16> to vector<160x64xbf16>
    %c0_3 = arith.constant 0 : index
    %c0_4 = arith.constant 0 : index
    %5 = vector.load %arg4[%c0_3, %c0_4] : memref<64x64xbf16, #tpu.memory_space<vmem>>, vector<64x64xbf16>
    %cst = arith.constant dense<0.000000e+00> : vector<160x64xf32>
    %6 = tpu.matmul %4, %5, %cst {dimension_numbers = #tpu.dot_dimension_numbers<[1], [0], [0], [1], [0, 0, 1, 1], [], []>} : vector<160x64xbf16>, vector<64x64xbf16>, vector<160x64xf32> -> vector<160x64xf32>
    %c0_5 = arith.constant 0 : index
    %c0_6 = arith.constant 0 : index
    %7 = vector.load %arg5[%c0_5, %c0_6] : memref<1x64xf32, #tpu.memory_space<vmem>>, vector<1x64xf32>
    %8 = vector.broadcast %7 : vector<1x64xf32> to vector<160x64xf32>
    %9 = arith.addf %6, %8 : vector<160x64xf32>
    %cst_7 = arith.constant 0.000000e+00 : f32
    %10 = vector.broadcast %cst_7 : f32 to vector<160x64xf32>
    %11 = arith.maximumf %9, %10 : vector<160x64xf32>
    %12 = arith.truncf %11 : vector<160x64xf32> to vector<160x64xbf16>
    %c0_8 = arith.constant 0 : index
    %c0_9 = arith.constant 0 : index
    %13 = vector.load %arg6[%c0_8, %c0_9] : memref<64x128xbf16, #tpu.memory_space<vmem>>, vector<64x128xbf16>
    %cst_10 = arith.constant dense<0.000000e+00> : vector<160x128xf32>
    %14 = tpu.matmul %12, %13, %cst_10 {dimension_numbers = #tpu.dot_dimension_numbers<[1], [0], [0], [1], [0, 0, 1, 1], [], []>} : vector<160x64xbf16>, vector<64x128xbf16>, vector<160x128xf32> -> vector<160x128xf32>
    %c0_11 = arith.constant 0 : index
    %c0_12 = arith.constant 0 : index
    %15 = vector.load %arg7[%c0_11, %c0_12] : memref<1x128xf32, #tpu.memory_space<vmem>>, vector<1x128xf32>
    %16 = vector.broadcast %15 : vector<1x128xf32> to vector<160x128xf32>
    %17 = arith.addf %14, %16 : vector<160x128xf32>
    %cst_13 = arith.constant 0.000000e+00 : f32
    %18 = vector.broadcast %cst_13 : f32 to vector<160x128xf32>
    %19 = arith.maximumf %17, %18 : vector<160x128xf32>
    %20 = arith.truncf %19 : vector<160x128xf32> to vector<160x128xbf16>
    %c0_14 = arith.constant 0 : index
    %c0_15 = arith.constant 0 : index
    %21 = vector.load %arg8[%c0_14, %c0_15] : memref<128x1024xbf16, #tpu.memory_space<vmem>>, vector<128x1024xbf16>
    %cst_16 = arith.constant dense<0.000000e+00> : vector<160x1024xf32>
    %22 = tpu.matmul %20, %21, %cst_16 {dimension_numbers = #tpu.dot_dimension_numbers<[1], [0], [0], [1], [0, 0, 1, 1], [], []>} : vector<160x128xbf16>, vector<128x1024xbf16>, vector<160x1024xf32> -> vector<160x1024xf32>
    %c0_17 = arith.constant 0 : index
    %c0_18 = arith.constant 0 : index
    %23 = vector.load %arg9[%c0_17, %c0_18] : memref<1x1024xf32, #tpu.memory_space<vmem>>, vector<1x1024xf32>
    %24 = vector.broadcast %23 : vector<1x1024xf32> to vector<160x1024xf32>
    %25 = arith.addf %22, %24 : vector<160x1024xf32>
    %cst_19 = arith.constant 0.000000e+00 : f32
    %26 = vector.broadcast %cst_19 : f32 to vector<160x1024xf32>
    %27 = arith.maximumf %25, %26 : vector<160x1024xf32>
    %c1_i32 = arith.constant 1 : i32
    %28 = arith.muli %arg1, %c1_i32 : i32
    %29 = arith.addi %28, %arg2 : i32
    %c160_i32 = arith.constant 160 : i32
    %30 = arith.muli %29, %c160_i32 : i32
    %31 = tpu.iota {dimensions = array<i32: 0>} : vector<160x1xi32>
    %32 = vector.broadcast %30 : i32 to vector<160x1xi32>
    %33 = arith.addi %32, %31 : vector<160x1xi32>
    %c300_i32 = arith.constant 300 : i32
    %34 = vector.broadcast %c300_i32 : i32 to vector<160x1xi32>
    %35 = arith.cmpi slt, %33, %34 : vector<160x1xi32>
    %cst_20 = arith.constant 0.000000e+00 : f32
    %36 = vector.shape_cast %35 : vector<160x1xi1> to vector<160x1xi1>
    %37 = vector.broadcast %36 : vector<160x1xi1> to vector<160x1024xi1>
    %38 = vector.broadcast %cst_20 : f32 to vector<160x1024xf32>
    %39 = arith.select %37, %27, %38 : vector<160x1024xi1>, vector<160x1024xf32>
    %c0_21 = arith.constant 0 : index
    %c0_22 = arith.constant 0 : index
    %40 = vector.load %arg11[%c0_21, %c0_22] : memref<1x1024xf32, #tpu.memory_space<vmem>>, vector<1x1024xf32>
    %cst_23 = arith.constant dense<0xFF800000> : vector<1024xf32>
    %41 = vector.multi_reduction <maximumf>, %39, %cst_23 [0] : vector<160x1024xf32> to vector<1024xf32>
    %42 = vector.shape_cast %41 : vector<1024xf32> to vector<1x1024xf32>
    %43 = arith.maximumf %40, %42 : vector<1x1024xf32>
    %c0_24 = arith.constant 0 : index
    %c0_25 = arith.constant 0 : index
    %44 = vector.load %arg11[%c0_24, %c0_25] : memref<1x1024xf32, #tpu.memory_space<vmem>>, vector<1x1024xf32>
    tpu.vector_store %arg11[%c0_24, %c0_25], %43 {strides = array<i32>} : memref<1x1024xf32, #tpu.memory_space<vmem>>, vector<1x1024xf32>,
    %c0_i32_26 = arith.constant 0 : i32
    %45 = arith.cmpi eq, %arg2, %c0_i32_26 : i32
    %46 = arith.extui %45 : i1 to i32
    %c0_i32_27 = arith.constant 0 : i32
    %47 = arith.cmpi ne, %46, %c0_i32_27 : i32
    scf.if %47 {
      %c0_28 = arith.constant 0 : index
      %c0_29 = arith.constant 0 : index
      %48 = vector.load %arg11[%c0_28, %c0_29] : memref<1x1024xf32, #tpu.memory_space<vmem>>, vector<1x1024xf32>
      %c0_30 = arith.constant 0 : index
      %c0_31 = arith.constant 0 : index
      %c0_32 = arith.constant 0 : index
      %49 = vector.load %arg10[%c0_30, %c0_31, %c0_32] : memref<1x1x1024xf32, #tpu.memory_space<vmem>>, vector<1x1x1024xf32>
      %50 = vector.shape_cast %49 : vector<1x1x1024xf32> to vector<1x1024xf32>
      %51 = vector.shape_cast %48 : vector<1x1024xf32> to vector<1x1x1024xf32>
      tpu.vector_store %arg10[%c0_30, %c0_31, %c0_32], %51 {strides = array<i32>} : memref<1x1x1024xf32, #tpu.memory_space<vmem>>, vector<1x1x1024xf32>,
    } else {
    }
    return
  }
  func.func @transform_0(%arg0: i32, %arg1: i32, %arg2: i32) -> (i32, i32, i32) {
    %c1_i32 = arith.constant 1 : i32
    %0 = arith.muli %arg1, %c1_i32 : i32
    %1 = arith.addi %0, %arg2 : i32
    %c0_i32 = arith.constant 0 : i32
    %c0_i32_0 = arith.constant 0 : i32
    return %arg0, %1, %c0_i32 : i32, i32, i32
  }
  func.func @transform_1(%arg0: i32, %arg1: i32, %arg2: i32) -> (i32, i32) {
    %c0_i32 = arith.constant 0 : i32
    %c0_i32_0 = arith.constant 0 : i32
    %c0_i32_1 = arith.constant 0 : i32
    return %c0_i32, %c0_i32_0 : i32, i32
  }
  func.func @transform_2(%arg0: i32, %arg1: i32, %arg2: i32) -> (i32, i32) {
    %c0_i32 = arith.constant 0 : i32
    %c0_i32_0 = arith.constant 0 : i32
    %c0_i32_1 = arith.constant 0 : i32
    return %c0_i32, %c0_i32_0 : i32, i32
  }
  func.func @transform_3(%arg0: i32, %arg1: i32, %arg2: i32) -> (i32, i32) {
    %c0_i32 = arith.constant 0 : i32
    %c0_i32_0 = arith.constant 0 : i32
    %c0_i32_1 = arith.constant 0 : i32
    return %c0_i32, %c0_i32_0 : i32, i32
  }
  func.func @transform_4(%arg0: i32, %arg1: i32, %arg2: i32) -> (i32, i32) {
    %c0_i32 = arith.constant 0 : i32
    %c0_i32_0 = arith.constant 0 : i32
    %c0_i32_1 = arith.constant 0 : i32
    return %c0_i32, %c0_i32_0 : i32, i32
  }
  func.func @transform_5(%arg0: i32, %arg1: i32, %arg2: i32) -> (i32, i32) {
    %c0_i32 = arith.constant 0 : i32
    %c0_i32_0 = arith.constant 0 : i32
    %c0_i32_1 = arith.constant 0 : i32
    return %c0_i32, %c0_i32_0 : i32, i32
  }
  func.func @transform_6(%arg0: i32, %arg1: i32, %arg2: i32) -> (i32, i32) {
    %c0_i32 = arith.constant 0 : i32
    %c0_i32_0 = arith.constant 0 : i32
    %c0_i32_1 = arith.constant 0 : i32
    return %c0_i32, %c0_i32_0 : i32, i32
  }
  func.func @transform_7(%arg0: i32, %arg1: i32, %arg2: i32) -> (i32, i32, i32) {
    %c2_i32 = arith.constant 2 : i32
    %0 = arith.muli %arg0, %c2_i32 : i32
    %1 = arith.addi %0, %arg1 : i32
    %c0_i32 = arith.constant 0 : i32
    %c0_i32_0 = arith.constant 0 : i32
    %c0_i32_1 = arith.constant 0 : i32
    return %1, %c0_i32, %c0_i32_0 : i32, i32, i32
  }
}

</mosaic_0001>

<llo_original>
// kernel: tpu_custom_call.1
$region0: #{tpu_custom_call.1}
  #allocation0 [shape = 'u32[]', space=smem, size = 0x4, offset = 0x4, fixed_abs, tag = 'smem constant byte address 0x4 - core index']
  #allocation1 [shape = 'u32[144,128]{1,0:T(1,128)}', space=vmem, size = 0x12000, scoped, tag = 'internal scratch']
  #allocation2 [shape = 'f32[1,1024]{1,0:T(1,128)}', space=vmem, size = 0x1000, scoped, tag = 'scratch operand']
  %s0 = inlined_call_operand.vmem [shape: bf16[2,320,64], index: 0, kind: input, shape index: {}]
  %s1 = inlined_call_operand.hbm [shape: bf16[64,64], index: 1, kind: input, shape index: {}]
  %s2 = inlined_call_operand.vmem [shape: f32[1,64], index: 2, kind: input, shape index: {}]
  %s3 = inlined_call_operand.hbm [shape: bf16[64,128], index: 3, kind: input, shape index: {}]
  %s4 = inlined_call_operand.vmem [shape: f32[1,128], index: 4, kind: input, shape index: {}]
  %s5 = inlined_call_operand.vmem [shape: bf16[128,1024], index: 5, kind: input, shape index: {}]
  %s6 = inlined_call_operand.vmem [shape: f32[1,1024], index: 6, kind: input, shape index: {}]
  %s7 = inlined_call_operand.hbm [shape: f32[4,1,1024], index: 7, kind: output, shape index: {}]
  %s8 = sld [smem:[#allocation0]]
  $region77: #{tpu_custom_call.1} parent=0
    _
  %s10 = ssub.s32 1, %s8
  %s11 = scalar_select 0, %s10, %s8
  $region1: #{tpu_custom_call.1} parent=0
    #allocation3 [shape = 'u8[16384]{0}', space=vmem, size = 0x4000, scoped, tag = 'input window, operand 1, single buffered']
    #allocation4 [shape = 's32[2]{0}', space=sflag, size = 0x8, scoped, tag = 'scoped memory for tpu_custom_call.1']
    #allocation5 [shape = 's32[2]{0}', space=sflag, size = 0x8, scoped, tag = 'scoped memory for tpu_custom_call.1']
    #allocation6 [shape = 'u8[16384]{0}', space=vmem, size = 0x4000, scoped, tag = 'input window, operand 3, single buffered']
    #allocation7 [shape = 's32[1]{0}', space=sflag, size = 0x4, scoped, tag = 'scoped memory for tpu_custom_call.1']
    #allocation8 [shape = 'u8[8192]{0}', space=vmem, size = 0x2000, scoped, tag = 'output window, operand 0']
    %12 = vsyncpa [#allocation4], 0
    %13 = vsyncpa [#allocation7], 0
    %14 = vsyncpa [#allocation5], 0
    %s15 = scalar_lea.sflag [#allocation5], 1
    %16 = vsyncpa %s15, 0
    loop: start=0, step=1, limit=6
    $region2: #{tpu_custom_call.1} parent=1 // loop_pre_header
      _
    $region3: #{tpu_custom_call.1} parent=1 // loop_header
      %s18 = sphi 0, %s22
      %p19 = scmp.ge.s32.totalorder %s18, 6
      %s25 = sphi 0, %s44
      %s26 = sphi 0, %s40
      %s27 = sphi 0, %s36
      %s28 = sphi 0, %s25
      %s29 = sphi 0, %s26
      %s30 = sphi 0, %s27
      %s31 = sphi 0, %s28
      %s32 = sphi 0, %s29
      %s33 = sphi 0, %s30
      %s51 = sphi 0, %s53
      %s54 = sphi 0, %s51
      %s55 = sphi 0, %s54
      %s71 = sphi 0, %s55
      %s75 = sphi 0, %s75
      %s77 = sphi 0, %s75
      %s78 = sphi 0, %s77
      %s92 = sphi 0, %s78
      %s96 = sphi 0, %s96
      %s98 = sphi 0, %s96
      %s99 = sphi 0, %s98
      %s113 = sphi 0, %s99
      %s117 = sphi 0, %s117
      %s119 = sphi 0, %s117
      %s120 = sphi 0, %s119
      %s134 = sphi 0, %s120
      %s138 = sphi 0, %s138
      %s140 = sphi 0, %s138
      %s141 = sphi 0, %s140
      %s155 = sphi 0, %s141
      %s159 = sphi 0, %s159
      %s161 = sphi 0, %s159
      %s162 = sphi 0, %s161
      %s176 = sphi 0, %s162
      %s180 = sphi 0, %s180
      %s182 = sphi 0, %s180
      %s183 = sphi 0, %s182
      %s197 = sphi 0, %s183
      %s207 = sphi 0, %s209
      %s210 = sphi 0, %s207
      %s211 = sphi 0, %s210
      %s227 = sphi 0, %s211
    $region4: #{tpu_custom_call.1} parent=1 // loop_header_branch
      %21 = sbr.rel (%p19) target = $region8
    $region5: #{tpu_custom_call.1} parent=1 // loop_body
      %s23 = ssub.s32 %s18, 1
      %s24 = ssub.s32 %s18, 2
      %s34 = sadd.s32 1, %s27
      %p35 = scmp.ge.s32.totalorder %s34, 1
      %s36 = scalar_select %p35, 0, %s34
      %s37 = sadd.s32 1, %s26
      %s38 = scalar_select %p35, %s37, %s26
      %p39 = scmp.ge.s32.totalorder %s38, 2
      %s40 = scalar_select %p39, 0, %s38
      %s41 = sadd.s32 1, %s25
      %s42 = scalar_select %p39, %s41, %s25
      %p43 = scmp.ge.s32.totalorder %s42, 2
      %s44 = scalar_select %p43, 0, %s42
      %s45 = sadd.s32 %s26, %s27
      %s46 = sadd.s32 %s40, %s36
      %s47 = ssub.s32 %s25, %s44
      %s48 = ssub.s32 %s45, %s46
      %s49 = sor.u32 %s47, %s48
      %p50 = scmp.eq.s32.totalorder %s49, 0
      %s52 = sadd.s32 %s51, 1
      %s53 = scalar_select %p50, %s51, %s52
      %p56 = pneg %p50
      %p57 = scmp.eq.s32.totalorder %s18, 3
      %p58 = por %p56, %p57
      %p59 = scmp.ne.s32.totalorder %s51, %s54
      %p60 = scmp.eq.s32.totalorder %s18, 0
      %p61 = por %p59, %p60
      %p62 = scmp.ne.s32.totalorder %s51, %s54
      %p63 = scmp.eq.s32.totalorder %s23, 3
      %p64 = por %p62, %p63
      %p65 = scmp.ne.s32.totalorder %s54, %s55
      %p66 = scmp.eq.s32.totalorder %s23, 0
      %p67 = por %p65, %p66
      %p68 = scmp.ne.s32.totalorder %s54, %s55
      %p69 = scmp.eq.s32.totalorder %s24, 3
      %p70 = por %p68, %p69
      %p72 = scmp.ne.s32.totalorder %s55, %s71
      %p73 = scmp.eq.s32.totalorder %s24, 0
      %p74 = por %p72, %p73
      %s76 = sadd.s32 %s75, 1
      %p79 = scmp.eq.s32.totalorder %s18, 3
      %p80 = scmp.ne.s32.totalorder %s75, %s77
      %p81 = scmp.eq.s32.totalorder %s18, 0
      %p82 = por %p80, %p81
      %p83 = scmp.ne.s32.totalorder %s75, %s77
      %p84 = scmp.eq.s32.totalorder %s23, 3
      %p85 = por %p83, %p84
      %p86 = scmp.ne.s32.totalorder %s77, %s78
      %p87 = scmp.eq.s32.totalorder %s23, 0
      %p88 = por %p86, %p87
      %p89 = scmp.ne.s32.totalorder %s77, %s78
      %p90 = scmp.eq.s32.totalorder %s24, 3
      %p91 = por %p89, %p90
      %p93 = scmp.ne.s32.totalorder %s78, %s92
      %p94 = scmp.eq.s32.totalorder %s24, 0
      %p95 = por %p93, %p94
      %s97 = sadd.s32 %s96, 1
      %p100 = scmp.eq.s32.totalorder %s18, 3
      %p101 = scmp.ne.s32.totalorder %s96, %s98
      %p102 = scmp.eq.s32.totalorder %s18, 0
      %p103 = por %p101, %p102
      %p104 = scmp.ne.s32.totalorder %s96, %s98
      %p105 = scmp.eq.s32.totalorder %s23, 3
      %p106 = por %p104, %p105
      %p107 = scmp.ne.s32.totalorder %s98, %s99
      %p108 = scmp.eq.s32.totalorder %s23, 0
      %p109 = por %p107, %p108
      %p110 = scmp.ne.s32.totalorder %s98, %s99
      %p111 = scmp.eq.s32.totalorder %s24, 3
      %p112 = por %p110, %p111
      %p114 = scmp.ne.s32.totalorder %s99, %s113
      %p115 = scmp.eq.s32.totalorder %s24, 0
      %p116 = por %p114, %p115
      %s118 = sadd.s32 %s117, 1
      %p121 = scmp.eq.s32.totalorder %s18, 3
      %p122 = scmp.ne.s32.totalorder %s117, %s119
      %p123 = scmp.eq.s32.totalorder %s18, 0
      %p124 = por %p122, %p123
      %p125 = scmp.ne.s32.totalorder %s117, %s119
      %p126 = scmp.eq.s32.totalorder %s23, 3
      %p127 = por %p125, %p126
      %p128 = scmp.ne.s32.totalorder %s119, %s120
      %p129 = scmp.eq.s32.totalorder %s23, 0
      %p130 = por %p128, %p129
      %p131 = scmp.ne.s32.totalorder %s119, %s120
      %p132 = scmp.eq.s32.totalorder %s24, 3
      %p133 = por %p131, %p132
      %p135 = scmp.ne.s32.totalorder %s120, %s134
      %p136 = scmp.eq.s32.totalorder %s24, 0
      %p137 = por %p135, %p136
      %s139 = sadd.s32 %s138, 1
      %p142 = scmp.eq.s32.totalorder %s18, 3
      %p143 = scmp.ne.s32.totalorder %s138, %s140
      %p144 = scmp.eq.s32.totalorder %s18, 0
      %p145 = por %p143, %p144
      %p146 = scmp.ne.s32.totalorder %s138, %s140
      %p147 = scmp.eq.s32.totalorder %s23, 3
      %p148 = por %p146, %p147
      %p149 = scmp.ne.s32.totalorder %s140, %s141
      %p150 = scmp.eq.s32.totalorder %s23, 0
      %p151 = por %p149, %p150
      %p152 = scmp.ne.s32.totalorder %s140, %s141
      %p153 = scmp.eq.s32.totalorder %s24, 3
      %p154 = por %p152, %p153
      %p156 = scmp.ne.s32.totalorder %s141, %s155
      %p157 = scmp.eq.s32.totalorder %s24, 0
      %p158 = por %p156, %p157
      %s160 = sadd.s32 %s159, 1
      %p163 = scmp.eq.s32.totalorder %s18, 3
      %p164 = scmp.ne.s32.totalorder %s159, %s161
      %p165 = scmp.eq.s32.totalorder %s18, 0
      %p166 = por %p164, %p165
      %p167 = scmp.ne.s32.totalorder %s159, %s161
      %p168 = scmp.eq.s32.totalorder %s23, 3
      %p169 = por %p167, %p168
      %p170 = scmp.ne.s32.totalorder %s161, %s162
      %p171 = scmp.eq.s32.totalorder %s23, 0
      %p172 = por %p170, %p171
      %p173 = scmp.ne.s32.totalorder %s161, %s162
      %p174 = scmp.eq.s32.totalorder %s24, 3
      %p175 = por %p173, %p174
      %p177 = scmp.ne.s32.totalorder %s162, %s176
      %p178 = scmp.eq.s32.totalorder %s24, 0
      %p179 = por %p177, %p178
      %s181 = sadd.s32 %s180, 1
      %p184 = scmp.eq.s32.totalorder %s18, 3
      %p185 = scmp.ne.s32.totalorder %s180, %s182
      %p186 = scmp.eq.s32.totalorder %s18, 0
      %p187 = por %p185, %p186
      %p188 = scmp.ne.s32.totalorder %s180, %s182
      %p189 = scmp.eq.s32.totalorder %s23, 3
      %p190 = por %p188, %p189
      %p191 = scmp.ne.s32.totalorder %s182, %s183
      %p192 = scmp.eq.s32.totalorder %s23, 0
      %p193 = por %p191, %p192
      %p194 = scmp.ne.s32.totalorder %s182, %s183
      %p195 = scmp.eq.s32.totalorder %s24, 3
      %p196 = por %p194, %p195
      %p198 = scmp.ne.s32.totalorder %s183, %s197
      %p199 = scmp.eq.s32.totalorder %s24, 0
      %p200 = por %p198, %p199
      %s201 = smul.u32 %s25, 2
      %s202 = sadd.s32 %s201, %s26
      %s203 = smul.u32 %s44, 2
      %s204 = sadd.s32 %s203, %s40
      %s205 = ssub.s32 %s202, %s204
      %p206 = scmp.eq.s32.totalorder %s205, 0
      %s208 = sadd.s32 %s207, 1
      %s209 = scalar_select %p206, %s207, %s208
      %p212 = pneg %p206
      %p213 = scmp.eq.s32.totalorder %s18, 3
      %p214 = por %p212, %p213
      %p215 = scmp.ne.s32.totalorder %s207, %s210
      %p216 = scmp.eq.s32.totalorder %s18, 0
      %p217 = por %p215, %p216
      %p218 = scmp.ne.s32.totalorder %s207, %s210
      %p219 = scmp.eq.s32.totalorder %s23, 3
      %p220 = por %p218, %p219
      %p221 = scmp.ne.s32.totalorder %s210, %s211
      %p222 = scmp.eq.s32.totalorder %s23, 0
      %p223 = por %p221, %p222
      %p224 = scmp.ne.s32.totalorder %s210, %s211
      %p225 = scmp.eq.s32.totalorder %s24, 3
      %p226 = por %p224, %p225
      %p228 = scmp.ne.s32.totalorder %s211, %s227
      %p229 = scmp.eq.s32.totalorder %s24, 0
      %p230 = por %p228, %p229
      %p231 = scmp.le.s32.totalorder 1, %s18
      %p232 = scmp.lt.s32.totalorder %s18, 5
      %p233 = pnand %p231, %p232
      %p234 = pneg %p233
      // Predicated region
      $region9: #{tpu_custom_call.1} parent=5 // pred_check
        _
      $region10: #{tpu_custom_call.1} parent=5 // pred_check_branch
        %236 = sbr.rel (%p233) target = $region12
      $region11: #{tpu_custom_call.1} parent=5 // pred_region
        %s237 = ssub.s32 %s18, 1
        // Predicated region
        $region13: #{tpu_custom_call.1} parent=11 // pred_check
          %p238 = pneg %p88
        $region14: #{tpu_custom_call.1} parent=11 // pred_check_branch
          %240 = sbr.rel (%p238) target = $region16
        $region15: #{tpu_custom_call.1} parent=11 // pred_region
          %s242 = ssub.s32 512, 512
          %243 = vsyncadd [#allocation4], %s242
          %s244 = sshll.u32 [#allocation3], 4
          %s245 = int_to_ptr.vmem [resolvable:$true] %s244
          %250 = dma.hbm_to_vmem [thread:$0]  %s1, 512, %s245, [#allocation4], 64, 64, 4
        $region16: #{tpu_custom_call.1} parent=11 // pred_fallthru
          _
        // Predicated region
        $region17: #{tpu_custom_call.1} parent=11 // pred_check
          %p251 = pneg %p109
        $region18: #{tpu_custom_call.1} parent=11 // pred_check_branch
          %253 = sbr.rel (%p251) target = $region20
        $region19: #{tpu_custom_call.1} parent=11 // pred_region
          _
        $region20: #{tpu_custom_call.1} parent=11 // pred_fallthru
          _
        // Predicated region
        $region21: #{tpu_custom_call.1} parent=11 // pred_check
          %p254 = pneg %p130
        $region22: #{tpu_custom_call.1} parent=11 // pred_check_branch
          %256 = sbr.rel (%p254) target = $region24
        $region23: #{tpu_custom_call.1} parent=11 // pred_region
          %s258 = ssub.s32 512, 512
          %259 = vsyncadd [#allocation7], %s258
          %s260 = sshll.u32 [#allocation6], 4
          %s261 = int_to_ptr.vmem [resolvable:$true] %s260
          %266 = dma.hbm_to_vmem [thread:$0]  %s3, 512, %s261, [#allocation7], 64, 64, 4
        $region24: #{tpu_custom_call.1} parent=11 // pred_fallthru
          _
        // Predicated region
        $region25: #{tpu_custom_call.1} parent=11 // pred_check
          %p267 = pneg %p151
        $region26: #{tpu_custom_call.1} parent=11 // pred_check_branch
          %269 = sbr.rel (%p267) target = $region28
        $region27: #{tpu_custom_call.1} parent=11 // pred_region
          _
        $region28: #{tpu_custom_call.1} parent=11 // pred_fallthru
          _
        // Predicated region
        $region29: #{tpu_custom_call.1} parent=11 // pred_check
          %p270 = pneg %p172
        $region30: #{tpu_custom_call.1} parent=11 // pred_check_branch
          %272 = sbr.rel (%p270) target = $region32
        $region31: #{tpu_custom_call.1} parent=11 // pred_region
          _
        $region32: #{tpu_custom_call.1} parent=11 // pred_fallthru
          _
        // Predicated region
        $region33: #{tpu_custom_call.1} parent=11 // pred_check
          %p273 = pneg %p193
        $region34: #{tpu_custom_call.1} parent=11 // pred_check_branch
          %275 = sbr.rel (%p273) target = $region36
        $region35: #{tpu_custom_call.1} parent=11 // pred_region
          _
        $region36: #{tpu_custom_call.1} parent=11 // pred_fallthru
          _
      $region12: #{tpu_custom_call.1} parent=5 // pred_fallthru
        _
      %p276 = scmp.lt.s32.totalorder %s18, 4
      // Predicated region
      $region37: #{tpu_custom_call.1} parent=5 // pred_check
        %p277 = pneg %p276
      $region38: #{tpu_custom_call.1} parent=5 // pred_check_branch
        %279 = sbr.rel (%p277) target = $region40
      $region39: #{tpu_custom_call.1} parent=5 // pred_region
        // Predicated region
        $region41: #{tpu_custom_call.1} parent=39 // pred_check
          %p280 = pneg %p61
        $region42: #{tpu_custom_call.1} parent=39 // pred_check_branch
          %282 = sbr.rel (%p280) target = $region44
        $region43: #{tpu_custom_call.1} parent=39 // pred_region
          %s283 = sadd.s32 %s26, %s27
          %s284 = smul.u32 20, %s283
          %p285 = scmp.lt.s32.totalorder %s25, 1
          %s286 = scalar_select %p285, %s25, 1
          %p287 = scmp.lt.s32.totalorder %s284, 39
          %s288 = scalar_select %p287, %s284, 39
          %s289 = smul.addr %s286, 40
          %s290 = sadd.s32 %s288, %s289
          %s291 = smul.addr %s290, 4
          %s292 = scalar_lea.vmem %s0, %s291
          %s293 = sadd.s32 %s26, %s27
          %s294 = smul.u32 20, %s293
        $region44: #{tpu_custom_call.1} parent=39 // pred_fallthru
          _
      $region40: #{tpu_custom_call.1} parent=5 // pred_fallthru
        _
      %p295 = scmp.le.s32.totalorder 1, %s18
      %p296 = scmp.lt.s32.totalorder %s18, 5
      %p297 = pnand %p295, %p296
      %p298 = pneg %p297
      // Predicated region
      $region45: #{tpu_custom_call.1} parent=5 // pred_check
        _
      $region46: #{tpu_custom_call.1} parent=5 // pred_check_branch
        %300 = sbr.rel (%p297) target = $region48
      $region47: #{tpu_custom_call.1} parent=5 // pred_region
        %s301 = ssub.s32 %s18, 1
        // Predicated region
        $region49: #{tpu_custom_call.1} parent=47 // pred_check
          %p302 = pneg %p88
        $region50: #{tpu_custom_call.1} parent=47 // pred_check_branch
          %304 = sbr.rel (%p302) target = $region52
        $region51: #{tpu_custom_call.1} parent=47 // pred_region
          %305 = dma.done [#allocation4], 512
        $region52: #{tpu_custom_call.1} parent=47 // pred_fallthru
          _
        // Predicated region
        $region53: #{tpu_custom_call.1} parent=47 // pred_check
          %p306 = pneg %p130
        $region54: #{tpu_custom_call.1} parent=47 // pred_check_branch
          %308 = sbr.rel (%p306) target = $region56
        $region55: #{tpu_custom_call.1} parent=47 // pred_region
          %309 = dma.done [#allocation7], 512
        $region56: #{tpu_custom_call.1} parent=47 // pred_fallthru
          _
        %s310 = sadd.s32 %s29, %s30
        %s311 = smul.u32 20, %s310
        %p312 = scmp.lt.s32.totalorder %s28, 1
        %s313 = scalar_select %p312, %s28, 1
        %p314 = scmp.lt.s32.totalorder %s311, 39
        %s315 = scalar_select %p314, %s311, 39
        %s316 = smul.addr %s313, 40
        %s317 = sadd.s32 %s315, %s316
        %s318 = smul.addr %s317, 4
        %s319 = scalar_lea.vmem %s0, %s318
        %p320 = pneg %p67
        %p321 = pneg %p64
        %p322 = pneg %p88
        %p323 = pneg %p85
        %p324 = pneg %p109
        %p325 = pneg %p106
        %p326 = pneg %p130
        %p327 = pneg %p127
        %p328 = pneg %p151
        %p329 = pneg %p148
        %p330 = pneg %p172
        %p331 = pneg %p169
        %p332 = pneg %p193
        %p333 = pneg %p190
        %p334 = pneg %p223
        %p335 = pneg %p220
        %s336 = sand.u32 %s210, 1
        %s337 = scalar_lea.sflag [#allocation5], %s336
        %s338 = sand.u32 %s210, 1
        %s339 = smul.addr %s338, 8
        %s340 = scalar_lea.vmem [#allocation8], %s339
        %s341 = sadd.s32 %s29, %s30
        %s342 = smul.u32 20, %s341
        %p343 = scmp.lt.s32.totalorder %s28, 1
        %s344 = scalar_select %p343, %s28, 1
        %p345 = scmp.lt.s32.totalorder %s342, 39
        %s346 = scalar_select %p345, %s342, 39
        %s347 = smul.addr %s344, 40
        %s348 = sadd.s32 %s346, %s347
        %s349 = smul.addr %s348, 4
        %s350 = scalar_lea.vmem %s0, %s349
        %s351 = sadd.s32 %s29, %s30
        %s352 = smul.u32 20, %s351
        %s353 = smul.u32 %s28, 2
        %s354 = sadd.s32 %s353, %s29
        %p356 = scmp.eq.s32.totalorder %s30, 0
        // Predicated region
        $region57: #{tpu_custom_call.1} parent=47 // pred_check
          %p357 = pneg %p356
        $region58: #{tpu_custom_call.1} parent=47 // pred_check_branch
          %359 = sbr.rel (%p357) target = $region60
        $region59: #{tpu_custom_call.1} parent=47 // pred_region
          %360 = vst [vmem:[#allocation2] sm:$0xff] 0.0
        $region60: #{tpu_custom_call.1} parent=47 // pred_fallthru
          _
        %v361 = vld [vmem:[%s350] sm:$0xf]
        %v362 = vld [vmem:[%s350 + $0x4] sm:$0xf]
        %v363 = vld [vmem:[%s350 + $0x8] sm:$0xf]
        %v364 = vld [vmem:[%s350 + $0xc] sm:$0xf]
        %v365 = vld [vmem:[%s350 + $0x10] sm:$0xf]
        %v366 = vld [vmem:[%s350 + $0x14] sm:$0xf]
        %v367 = vld [vmem:[%s350 + $0x18] sm:$0xf]
        %v368 = vld [vmem:[%s350 + $0x1c] sm:$0xf]
        %v369 = vld [vmem:[%s350 + $0x20] sm:$0xf]
        %v370 = vld [vmem:[%s350 + $0x24] sm:$0xf]
        %v371 = vld [vmem:[%s350 + $0x28] sm:$0xf]
        %v372 = vld [vmem:[%s350 + $0x2c] sm:$0xf]
        %v373 = vld [vmem:[%s350 + $0x30] sm:$0xf]
        %v374 = vld [vmem:[%s350 + $0x34] sm:$0xf]
        %v375 = vld [vmem:[%s350 + $0x38] sm:$0xf]
        %v376 = vld [vmem:[%s350 + $0x3c] sm:$0xf]
        %v377 = vld [vmem:[%s350 + $0x40] sm:$0xf]
        %v378 = vld [vmem:[%s350 + $0x44] sm:$0xf]
        %v379 = vld [vmem:[%s350 + $0x48] sm:$0xf]
        %v380 = vld [vmem:[%s350 + $0x4c] sm:$0xf]
        %v381 = vld [vmem:[#allocation3] sm:$0xf]
        %v382 = vld [vmem:[#allocation3 + $0x4] sm:$0xf]
        %v383 = vld [vmem:[#allocation3 + $0x8] sm:$0xf]
        %v384 = vld [vmem:[#allocation3 + $0xc] sm:$0xf]
        %v385 = vld [vmem:[#allocation3 + $0x10] sm:$0xf]
        %v386 = vld [vmem:[#allocation3 + $0x14] sm:$0xf]
        %v387 = vld [vmem:[#allocation3 + $0x18] sm:$0xf]
        %v388 = vld [vmem:[#allocation3 + $0x1c] sm:$0xf]
        %v389 = vld [vmem:[%s2] sm:$0x1]
        %v391 = vlaneseq
        %v392 = vshrl.u32 %v391, 7
        %v393 = vsub.s32 0, %v392
        %v394 = vrot.slane %v389, %v393
        %v416 = vunpack.c.l.b16 %v361
        %v417 = vunpack.c.l.b16 %v362
        %v418 = vunpack.c.l.b16 %v363
        %v419 = vunpack.c.l.b16 %v364
        %v420 = vunpack.c.l.b16 %v365
        %v421 = vunpack.c.l.b16 %v366
        %v422 = vunpack.c.l.b16 %v367
        %v423 = vunpack.c.l.b16 %v368
        %v424 = vunpack.c.l.b16 %v369
        %v425 = vunpack.c.l.b16 %v370
        %v426 = vunpack.c.l.b16 %v371
        %v427 = vunpack.c.l.b16 %v372
        %v428 = vunpack.c.l.b16 %v373
        %v429 = vunpack.c.l.b16 %v374
        %v430 = vunpack.c.l.b16 %v375
        %v431 = vunpack.c.l.b16 %v376
        %v432 = vunpack.c.l.b16 %v377
        %v433 = vunpack.c.l.b16 %v378
        %v434 = vunpack.c.l.b16 %v379
        %v435 = vunpack.c.l.b16 %v380
        %v436 = vpack.c.b16 %v417, %v416
        %v437 = vpack.c.b16 %v419, %v418
        %v438 = vpack.c.b16 %v421, %v420
        %v439 = vpack.c.b16 %v423, %v422
        %v440 = vpack.c.b16 %v425, %v424
        %v441 = vpack.c.b16 %v427, %v426
        %v442 = vpack.c.b16 %v429, %v428
        %v443 = vpack.c.b16 %v431, %v430
        %v444 = vpack.c.b16 %v433, %v432
        %v445 = vpack.c.b16 %v435, %v434
        %v454 = vunpack.c.l.b16 %v381
        %v455 = vunpack.c.l.b16 %v382
        %v456 = vunpack.c.l.b16 %v383
        %v457 = vunpack.c.l.b16 %v384
        %v458 = vunpack.c.l.b16 %v385
        %v459 = vunpack.c.l.b16 %v386
        %v460 = vunpack.c.l.b16 %v387
        %v461 = vunpack.c.l.b16 %v388
        %v462 = vpack.c.b16 %v455, %v454
        %v463 = vpack.c.b16 %v457, %v456
        %v464 = vpack.c.b16 %v459, %v458
        %v465 = vpack.c.b16 %v461, %v460
        %vm470 = vcmask 523264
        %v472 = vsel %vm470, %v436, 0
        %v475 = vsel %vm470, %v437, 0
        %v478 = vsel %vm470, %v438, 0
        %v481 = vsel %vm470, %v439, 0
        %v484 = vsel %vm470, %v440, 0
        %v487 = vsel %vm470, %v441, 0
        %v490 = vsel %vm470, %v442, 0
        %v493 = vsel %vm470, %v443, 0
        %v496 = vsel %vm470, %v444, 0
        %v499 = vsel %vm470, %v445, 0
        %501 = vmatprep.subr.bf16.mxu0 0
        %502 = vmatpush1.bf16.msra.mxu0 %v462
        %503 = vmatprep.subr.bf16.mxu0 0
        %504 = vmatpush1.bf16.msra.mxu0 %v463
        %505 = vmatprep.subr.bf16.mxu0 0
        %506 = vmatpush1.bf16.msra.mxu0 %v464
        %507 = vmatprep.subr.bf16.mxu0 0
        %508 = vmatpush1.bf16.msra.mxu0 %v465
        %509 = vmatprep.subr.bf16.mxu0 0
        %510 = vmatpush1.bf16.msra.mxu0 0
        %511 = vmatprep.subr.bf16.mxu0 0
        %512 = vmatpush1.bf16.msra.mxu0 0
        %513 = vmatprep.subr.bf16.mxu0 0
        %514 = vmatpush1.bf16.msra.mxu0 0
        %515 = vmatprep.subr.bf16.mxu0 0
        %516 = vmatpush1.bf16.msra.mxu0 0
        %517 = vmatprep.subr.bf16.mxu0 0
        %518 = vmatpush1.bf16.msra.mxu0 0
        %519 = vmatprep.subr.bf16.mxu0 0
        %520 = vmatpush1.bf16.msra.mxu0 0
        %521 = vmatprep.subr.bf16.mxu0 0
        %522 = vmatpush1.bf16.msra.mxu0 0
        %523 = vmatprep.subr.bf16.mxu0 0
        %524 = vmatpush1.bf16.msra.mxu0 0
        %525 = vmatprep.subr.bf16.mxu0 0
        %526 = vmatpush1.bf16.msra.mxu0 0
        %527 = vmatprep.subr.bf16.mxu0 0
        %528 = vmatpush1.bf16.msra.mxu0 0
        %529 = vmatprep.subr.bf16.mxu0 0
        %530 = vmatpush1.bf16.msra.mxu0 0
        %531 = vmatprep.subr.bf16.mxu0 0
        %532 = vmatpush1.bf16.msra.mxu0 0
        %533 = vmatprep.mubr.bf16.mxu0 0
        %534 = vmatmul.mubr.bf16.gmra.mrb[0].mxu0 %v472
        %v535 = vpop.f32.mrb[0].mxu0
        %v536 = vadd.f32 %v394, %v535
        %v537 = vpop.f32.mrb[0].mxu0
        %v538 = vpop.f32.mrb[0].mxu0
        %v539 = vadd.f32 %v394, %v538
        %v540 = vpop.f32.mrb[0].mxu0
        %541 = vmatprep.mubr.bf16.mxu0 0
        %542 = vmatmul.mubr.bf16.gmra.mrb[0].mxu0 %v475
        %v543 = vpop.f32.mrb[0].mxu0
        %v544 = vadd.f32 %v394, %v543
        %v545 = vpop.f32.mrb[0].mxu0
        %v546 = vpop.f32.mrb[0].mxu0
        %v547 = vadd.f32 %v394, %v546
        %v548 = vpop.f32.mrb[0].mxu0
        %549 = vmatprep.mubr.bf16.mxu0 0
        %550 = vmatmul.mubr.bf16.gmra.mrb[0].mxu0 %v478
        %v551 = vpop.f32.mrb[0].mxu0
        %v552 = vadd.f32 %v394, %v551
        %v553 = vpop.f32.mrb[0].mxu0
        %v554 = vpop.f32.mrb[0].mxu0
        %v555 = vadd.f32 %v394, %v554
        %v556 = vpop.f32.mrb[0].mxu0
        %557 = vmatprep.mubr.bf16.mxu0 0
        %558 = vmatmul.mubr.bf16.gmra.mrb[0].mxu0 %v481
        %v559 = vpop.f32.mrb[0].mxu0
        %v560 = vadd.f32 %v394, %v559
        %v561 = vpop.f32.mrb[0].mxu0
        %v562 = vpop.f32.mrb[0].mxu0
        %v563 = vadd.f32 %v394, %v562
        %v564 = vpop.f32.mrb[0].mxu0
        %565 = vmatprep.mubr.bf16.mxu0 0
        %566 = vmatmul.mubr.bf16.gmra.mrb[0].mxu0 %v484
        %v567 = vpop.f32.mrb[0].mxu0
        %v568 = vadd.f32 %v394, %v567
        %v569 = vpop.f32.mrb[0].mxu0
        %v570 = vpop.f32.mrb[0].mxu0
        %v571 = vadd.f32 %v394, %v570
        %v572 = vpop.f32.mrb[0].mxu0
        %573 = vmatprep.mubr.bf16.mxu0 0
        %574 = vmatmul.mubr.bf16.gmra.mrb[0].mxu0 %v487
        %v575 = vpop.f32.mrb[0].mxu0
        %v576 = vadd.f32 %v394, %v575
        %v577 = vpop.f32.mrb[0].mxu0
        %v578 = vpop.f32.mrb[0].mxu0
        %v579 = vadd.f32 %v394, %v578
        %v580 = vpop.f32.mrb[0].mxu0
        %581 = vmatprep.mubr.bf16.mxu0 0
        %582 = vmatmul.mubr.bf16.gmra.mrb[0].mxu0 %v490
        %v583 = vpop.f32.mrb[0].mxu0
        %v584 = vadd.f32 %v394, %v583
        %v585 = vpop.f32.mrb[0].mxu0
        %v586 = vpop.f32.mrb[0].mxu0
        %v587 = vadd.f32 %v394, %v586
        %v588 = vpop.f32.mrb[0].mxu0
        %589 = vmatprep.mubr.bf16.mxu0 0
        %590 = vmatmul.mubr.bf16.gmra.mrb[0].mxu0 %v493
        %v591 = vpop.f32.mrb[0].mxu0
        %v592 = vadd.f32 %v394, %v591
        %v593 = vpop.f32.mrb[0].mxu0
        %v594 = vpop.f32.mrb[0].mxu0
        %v595 = vadd.f32 %v394, %v594
        %v596 = vpop.f32.mrb[0].mxu0
        %597 = vmatprep.mubr.bf16.mxu0 0
        %598 = vmatmul.mubr.bf16.gmra.mrb[0].mxu0 %v496
        %v599 = vpop.f32.mrb[0].mxu0
        %v600 = vadd.f32 %v394, %v599
        %v601 = vpop.f32.mrb[0].mxu0
        %v602 = vpop.f32.mrb[0].mxu0
        %v603 = vadd.f32 %v394, %v602
        %v604 = vpop.f32.mrb[0].mxu0
        %605 = vmatprep.mubr.bf16.mxu0 0
        %606 = vmatmul.mubr.bf16.gmra.mrb[0].mxu0 %v499
        %v607 = vpop.f32.mrb[0].mxu0
        %v608 = vadd.f32 %v394, %v607
        %v609 = vpop.f32.mrb[0].mxu0
        %v610 = vpop.f32.mrb[0].mxu0
        %v611 = vadd.f32 %v394, %v610
        %v612 = vpop.f32.mrb[0].mxu0
        %613 = vdwg.mxu0
        %v614 = vmax.f32 %v536, 0.0
        %v615 = vmax.f32 %v539, 0.0
        %v616 = vmax.f32 %v544, 0.0
        %v617 = vmax.f32 %v547, 0.0
        %v618 = vmax.f32 %v552, 0.0
        %v619 = vmax.f32 %v555, 0.0
        %v620 = vmax.f32 %v560, 0.0
        %v621 = vmax.f32 %v563, 0.0
        %v622 = vmax.f32 %v568, 0.0
        %v623 = vmax.f32 %v571, 0.0
        %v624 = vmax.f32 %v576, 0.0
        %v625 = vmax.f32 %v579, 0.0
        %v626 = vmax.f32 %v584, 0.0
        %v627 = vmax.f32 %v587, 0.0
        %v628 = vmax.f32 %v592, 0.0
        %v629 = vmax.f32 %v595, 0.0
        %v630 = vmax.f32 %v600, 0.0
        %v631 = vmax.f32 %v603, 0.0
        %v632 = vmax.f32 %v608, 0.0
        %v633 = vmax.f32 %v611, 0.0
        %v634 = vpack.c.bf16 %v615, %v614
        %v635 = vpack.c.bf16 %v617, %v616
        %v636 = vpack.c.bf16 %v619, %v618
        %v637 = vpack.c.bf16 %v621, %v620
        %v638 = vpack.c.bf16 %v623, %v622
        %v639 = vpack.c.bf16 %v625, %v624
        %v640 = vpack.c.bf16 %v627, %v626
        %v641 = vpack.c.bf16 %v629, %v628
        %v642 = vpack.c.bf16 %v631, %v630
        %v643 = vpack.c.bf16 %v633, %v632
        %v644 = vld [vmem:[#allocation6] sm:$0xf]
        %v645 = vld [vmem:[#allocation6 + $0x4] sm:$0xf]
        %v646 = vld [vmem:[#allocation6 + $0x8] sm:$0xf]
        %v647 = vld [vmem:[#allocation6 + $0xc] sm:$0xf]
        %v648 = vld [vmem:[#allocation6 + $0x10] sm:$0xf]
        %v649 = vld [vmem:[#allocation6 + $0x14] sm:$0xf]
        %v650 = vld [vmem:[#allocation6 + $0x18] sm:$0xf]
        %v651 = vld [vmem:[#allocation6 + $0x1c] sm:$0xf]
        %v652 = vld [vmem:[%s4] sm:$0x1]
        %v654 = vlaneseq
        %v655 = vshrl.u32 %v654, 7
        %v656 = vsub.s32 0, %v655
        %v657 = vrot.slane %v652, %v656
        %v667 = vunpack.c.l.b16 %v644
        %v668 = vunpack.c.l.b16 %v645
        %v669 = vunpack.c.l.b16 %v646
        %v670 = vunpack.c.l.b16 %v647
        %v671 = vunpack.c.l.b16 %v648
        %v672 = vunpack.c.l.b16 %v649
        %v673 = vunpack.c.l.b16 %v650
        %v674 = vunpack.c.l.b16 %v651
        %v675 = vpack.c.b16 %v668, %v667
        %v676 = vpack.c.b16 %v670, %v669
        %v677 = vpack.c.b16 %v672, %v671
        %v678 = vpack.c.b16 %v674, %v673
        %v684 = vsel %vm470, %v634, 0
        %v687 = vsel %vm470, %v635, 0
        %v690 = vsel %vm470, %v636, 0
        %v693 = vsel %vm470, %v637, 0
        %v696 = vsel %vm470, %v638, 0
        %v699 = vsel %vm470, %v639, 0
        %v702 = vsel %vm470, %v640, 0
        %v705 = vsel %vm470, %v641, 0
        %v708 = vsel %vm470, %v642, 0
        %v711 = vsel %vm470, %v643, 0
        %713 = vmatprep.subr.bf16.mxu0 0
        %714 = vmatpush1.bf16.msra.mxu0 %v675
        %715 = vmatprep.subr.bf16.mxu0 0
        %716 = vmatpush1.bf16.msra.mxu0 %v676
        %717 = vmatprep.subr.bf16.mxu0 0
        %718 = vmatpush1.bf16.msra.mxu0 %v677
        %719 = vmatprep.subr.bf16.mxu0 0
        %720 = vmatpush1.bf16.msra.mxu0 %v678
        %721 = vmatprep.subr.bf16.mxu0 0
        %722 = vmatpush1.bf16.msra.mxu0 0
        %723 = vmatprep.subr.bf16.mxu0 0
        %724 = vmatpush1.bf16.msra.mxu0 0
        %725 = vmatprep.subr.bf16.mxu0 0
        %726 = vmatpush1.bf16.msra.mxu0 0
        %727 = vmatprep.subr.bf16.mxu0 0
        %728 = vmatpush1.bf16.msra.mxu0 0
        %729 = vmatprep.subr.bf16.mxu0 0
        %730 = vmatpush1.bf16.msra.mxu0 0
        %731 = vmatprep.subr.bf16.mxu0 0
        %732 = vmatpush1.bf16.msra.mxu0 0
        %733 = vmatprep.subr.bf16.mxu0 0
        %734 = vmatpush1.bf16.msra.mxu0 0
        %735 = vmatprep.subr.bf16.mxu0 0
        %736 = vmatpush1.bf16.msra.mxu0 0
        %737 = vmatprep.subr.bf16.mxu0 0
        %738 = vmatpush1.bf16.msra.mxu0 0
        %739 = vmatprep.subr.bf16.mxu0 0
        %740 = vmatpush1.bf16.msra.mxu0 0
        %741 = vmatprep.subr.bf16.mxu0 0
        %742 = vmatpush1.bf16.msra.mxu0 0
        %743 = vmatprep.subr.bf16.mxu0 0
        %744 = vmatpush1.bf16.msra.mxu0 0
        %745 = vmatprep.mubr.bf16.mxu0 0
        %746 = vmatmul.mubr.bf16.gmra.mrb[0].mxu0 %v684
        %v747 = vpop.f32.mrb[0].mxu0
        %v748 = vadd.f32 %v657, %v747
        %v749 = vpop.f32.mrb[0].mxu0
        %v750 = vpop.f32.mrb[0].mxu0
        %v751 = vadd.f32 %v657, %v750
        %v752 = vpop.f32.mrb[0].mxu0
        %753 = vmatprep.mubr.bf16.mxu0 0
        %754 = vmatmul.mubr.bf16.gmra.mrb[0].mxu0 %v687
        %v755 = vpop.f32.mrb[0].mxu0
        %v756 = vadd.f32 %v657, %v755
        %v757 = vpop.f32.mrb[0].mxu0
        %v758 = vpop.f32.mrb[0].mxu0
        %v759 = vadd.f32 %v657, %v758
        %v760 = vpop.f32.mrb[0].mxu0
        %761 = vmatprep.mubr.bf16.mxu0 0
        %762 = vmatmul.mubr.bf16.gmra.mrb[0].mxu0 %v690
        %v763 = vpop.f32.mrb[0].mxu0
        %v764 = vadd.f32 %v657, %v763
        %v765 = vpop.f32.mrb[0].mxu0
        %v766 = vpop.f32.mrb[0].mxu0
        %v767 = vadd.f32 %v657, %v766
        %v768 = vpop.f32.mrb[0].mxu0
        %769 = vmatprep.mubr.bf16.mxu0 0
        %770 = vmatmul.mubr.bf16.gmra.mrb[0].mxu0 %v693
        %v771 = vpop.f32.mrb[0].mxu0
        %v772 = vadd.f32 %v657, %v771
        %v773 = vpop.f32.mrb[0].mxu0
        %v774 = vpop.f32.mrb[0].mxu0
        %v775 = vadd.f32 %v657, %v774
        %v776 = vpop.f32.mrb[0].mxu0
        %777 = vmatprep.mubr.bf16.mxu0 0
        %778 = vmatmul.mubr.bf16.gmra.mrb[0].mxu0 %v696
        %v779 = vpop.f32.mrb[0].mxu0
        %v780 = vadd.f32 %v657, %v779
        %v781 = vpop.f32.mrb[0].mxu0
        %v782 = vpop.f32.mrb[0].mxu0
        %v783 = vadd.f32 %v657, %v782
        %v784 = vpop.f32.mrb[0].mxu0
        %785 = vmatprep.mubr.bf16.mxu0 0
        %786 = vmatmul.mubr.bf16.gmra.mrb[0].mxu0 %v699
        %v787 = vpop.f32.mrb[0].mxu0
        %v788 = vadd.f32 %v657, %v787
        %v789 = vpop.f32.mrb[0].mxu0
        %v790 = vpop.f32.mrb[0].mxu0
        %v791 = vadd.f32 %v657, %v790
        %v792 = vpop.f32.mrb[0].mxu0
        %793 = vmatprep.mubr.bf16.mxu0 0
        %794 = vmatmul.mubr.bf16.gmra.mrb[0].mxu0 %v702
        %v795 = vpop.f32.mrb[0].mxu0
        %v796 = vadd.f32 %v657, %v795
        %v797 = vpop.f32.mrb[0].mxu0
        %v798 = vpop.f32.mrb[0].mxu0
        %v799 = vadd.f32 %v657, %v798
        %v800 = vpop.f32.mrb[0].mxu0
        %801 = vmatprep.mubr.bf16.mxu0 0
        %802 = vmatmul.mubr.bf16.gmra.mrb[0].mxu0 %v705
        %v803 = vpop.f32.mrb[0].mxu0
        %v804 = vadd.f32 %v657, %v803
        %v805 = vpop.f32.mrb[0].mxu0
        %v806 = vpop.f32.mrb[0].mxu0
        %v807 = vadd.f32 %v657, %v806
        %v808 = vpop.f32.mrb[0].mxu0
        %809 = vmatprep.mubr.bf16.mxu0 0
        %810 = vmatmul.mubr.bf16.gmra.mrb[0].mxu0 %v708
        %v811 = vpop.f32.mrb[0].mxu0
        %v812 = vadd.f32 %v657, %v811
        %v813 = vpop.f32.mrb[0].mxu0
        %v814 = vpop.f32.mrb[0].mxu0
        %v815 = vadd.f32 %v657, %v814
        %v816 = vpop.f32.mrb[0].mxu0
        %817 = vmatprep.mubr.bf16.mxu0 0
        %818 = vmatmul.mubr.bf16.gmra.mrb[0].mxu0 %v711
        %v819 = vpop.f32.mrb[0].mxu0
        %v820 = vadd.f32 %v657, %v819
        %v821 = vpop.f32.mrb[0].mxu0
        %v822 = vpop.f32.mrb[0].mxu0
        %v823 = vadd.f32 %v657, %v822
        %v824 = vpop.f32.mrb[0].mxu0
        %825 = vdwg.mxu0
        %v826 = vmax.f32 %v748, 0.0
        %v827 = vmax.f32 %v751, 0.0
        %v828 = vmax.f32 %v756, 0.0
        %v829 = vmax.f32 %v759, 0.0
        %v830 = vmax.f32 %v764, 0.0
        %v831 = vmax.f32 %v767, 0.0
        %v832 = vmax.f32 %v772, 0.0
        %v833 = vmax.f32 %v775, 0.0
        %v834 = vmax.f32 %v780, 0.0
        %v835 = vmax.f32 %v783, 0.0
        %v836 = vmax.f32 %v788, 0.0
        %v837 = vmax.f32 %v791, 0.0
        %v838 = vmax.f32 %v796, 0.0
        %v839 = vmax.f32 %v799, 0.0
        %v840 = vmax.f32 %v804, 0.0
        %v841 = vmax.f32 %v807, 0.0
        %v842 = vmax.f32 %v812, 0.0
        %v843 = vmax.f32 %v815, 0.0
        %v844 = vmax.f32 %v820, 0.0
        %v845 = vmax.f32 %v823, 0.0
        %v846 = vpack.c.bf16 %v827, %v826
        %v847 = vpack.c.bf16 %v829, %v828
        %v848 = vpack.c.bf16 %v831, %v830
        %v849 = vpack.c.bf16 %v833, %v832
        %v850 = vpack.c.bf16 %v835, %v834
        %v851 = vpack.c.bf16 %v837, %v836
        %v852 = vpack.c.bf16 %v839, %v838
        %v853 = vpack.c.bf16 %v841, %v840
        %v854 = vpack.c.bf16 %v843, %v842
        %v855 = vpack.c.bf16 %v845, %v844
        %v856 = vld [vmem:[%s5] sm:$0xff]
        %v857 = vld [vmem:[%s5 + $0x8] sm:$0xff]
        %v858 = vld [vmem:[%s5 + $0x10] sm:$0xff]
        %v859 = vld [vmem:[%s5 + $0x18] sm:$0xff]
        %v860 = vld [vmem:[%s5 + $0x20] sm:$0xff]
        %v861 = vld [vmem:[%s5 + $0x28] sm:$0xff]
        %v862 = vld [vmem:[%s5 + $0x30] sm:$0xff]
        %v863 = vld [vmem:[%s5 + $0x38] sm:$0xff]
        %v864 = vld [vmem:[%s5 + $0x40] sm:$0xff]
        %v865 = vld [vmem:[%s5 + $0x48] sm:$0xff]
        %v866 = vld [vmem:[%s5 + $0x50] sm:$0xff]
        %v867 = vld [vmem:[%s5 + $0x58] sm:$0xff]
        %v868 = vld [vmem:[%s5 + $0x60] sm:$0xff]
        %v869 = vld [vmem:[%s5 + $0x68] sm:$0xff]
        %v870 = vld [vmem:[%s5 + $0x70] sm:$0xff]
        %v871 = vld [vmem:[%s5 + $0x78] sm:$0xff]
        %v872 = vld [vmem:[%s5 + $0x80] sm:$0xff]
        %v873 = vld [vmem:[%s5 + $0x88] sm:$0xff]
        %v874 = vld [vmem:[%s5 + $0x90] sm:$0xff]
        %v875 = vld [vmem:[%s5 + $0x98] sm:$0xff]
        %v876 = vld [vmem:[%s5 + $0xa0] sm:$0xff]
        %v877 = vld [vmem:[%s5 + $0xa8] sm:$0xff]
        %v878 = vld [vmem:[%s5 + $0xb0] sm:$0xff]
        %v879 = vld [vmem:[%s5 + $0xb8] sm:$0xff]
        %v880 = vld [vmem:[%s5 + $0xc0] sm:$0xff]
        %v881 = vld [vmem:[%s5 + $0xc8] sm:$0xff]
        %v882 = vld [vmem:[%s5 + $0xd0] sm:$0xff]
        %v883 = vld [vmem:[%s5 + $0xd8] sm:$0xff]
        %v884 = vld [vmem:[%s5 + $0xe0] sm:$0xff]
        %v885 = vld [vmem:[%s5 + $0xe8] sm:$0xff]
        %v886 = vld [vmem:[%s5 + $0xf0] sm:$0xff]
        %v887 = vld [vmem:[%s5 + $0xf8] sm:$0xff]
        %v888 = vld [vmem:[%s5 + $0x100] sm:$0xff]
        %v889 = vld [vmem:[%s5 + $0x108] sm:$0xff]
        %v890 = vld [vmem:[%s5 + $0x110] sm:$0xff]
        %v891 = vld [vmem:[%s5 + $0x118] sm:$0xff]
        %v892 = vld [vmem:[%s5 + $0x120] sm:$0xff]
        %v893 = vld [vmem:[%s5 + $0x128] sm:$0xff]
        %v894 = vld [vmem:[%s5 + $0x130] sm:$0xff]
        %v895 = vld [vmem:[%s5 + $0x138] sm:$0xff]
        %v896 = vld [vmem:[%s5 + $0x140] sm:$0xff]
        %v897 = vld [vmem:[%s5 + $0x148] sm:$0xff]
        %v898 = vld [vmem:[%s5 + $0x150] sm:$0xff]
        %v899 = vld [vmem:[%s5 + $0x158] sm:$0xff]
        %v900 = vld [vmem:[%s5 + $0x160] sm:$0xff]
        %v901 = vld [vmem:[%s5 + $0x168] sm:$0xff]
        %v902 = vld [vmem:[%s5 + $0x170] sm:$0xff]
        %v903 = vld [vmem:[%s5 + $0x178] sm:$0xff]
        %v904 = vld [vmem:[%s5 + $0x180] sm:$0xff]
        %v905 = vld [vmem:[%s5 + $0x188] sm:$0xff]
        %v906 = vld [vmem:[%s5 + $0x190] sm:$0xff]
        %v907 = vld [vmem:[%s5 + $0x198] sm:$0xff]
        %v908 = vld [vmem:[%s5 + $0x1a0] sm:$0xff]
        %v909 = vld [vmem:[%s5 + $0x1a8] sm:$0xff]
        %v910 = vld [vmem:[%s5 + $0x1b0] sm:$0xff]
        %v911 = vld [vmem:[%s5 + $0x1b8] sm:$0xff]
        %v912 = vld [vmem:[%s5 + $0x1c0] sm:$0xff]
        %v913 = vld [vmem:[%s5 + $0x1c8] sm:$0xff]
        %v914 = vld [vmem:[%s5 + $0x1d0] sm:$0xff]
        %v915 = vld [vmem:[%s5 + $0x1d8] sm:$0xff]
        %v916 = vld [vmem:[%s5 + $0x1e0] sm:$0xff]
        %v917 = vld [vmem:[%s5 + $0x1e8] sm:$0xff]
        %v918 = vld [vmem:[%s5 + $0x1f0] sm:$0xff]
        %v919 = vld [vmem:[%s5 + $0x1f8] sm:$0xff]
        %v920 = vld [vmem:[%s6] sm:$0xff]
        %v922 = vlaneseq
        %v923 = vshrl.u32 %v922, 7
        %v924 = vsub.s32 0, %v923
        %v925 = vrot.slane %v920, %v924
        %v926 = vlaneseq
        %v927 = vshrl.u32 %v926, 7
        %v928 = vsub.s32 1, %v927
        %v929 = vrot.slane %v920, %v928
        %v930 = vlaneseq
        %v931 = vshrl.u32 %v930, 7
        %v932 = vsub.s32 2, %v931
        %v933 = vrot.slane %v920, %v932
        %v934 = vlaneseq
        %v935 = vshrl.u32 %v934, 7
        %v936 = vsub.s32 3, %v935
        %v937 = vrot.slane %v920, %v936
        %v938 = vlaneseq
        %v939 = vshrl.u32 %v938, 7
        %v940 = vsub.s32 4, %v939
        %v941 = vrot.slane %v920, %v940
        %v942 = vlaneseq
        %v943 = vshrl.u32 %v942, 7
        %v944 = vsub.s32 5, %v943
        %v945 = vrot.slane %v920, %v944
        %v946 = vlaneseq
        %v947 = vshrl.u32 %v946, 7
        %v948 = vsub.s32 6, %v947
        %v949 = vrot.slane %v920, %v948
        %v950 = vlaneseq
        %v951 = vshrl.u32 %v950, 7
        %v952 = vsub.s32 7, %v951
        %v953 = vrot.slane %v920, %v952
        %v1026 = vunpack.c.l.b16 %v856
        %v1027 = vunpack.c.h.b16 %v856
        %v1028 = vunpack.c.l.b16 %v857
        %v1029 = vunpack.c.h.b16 %v857
        %v1030 = vunpack.c.l.b16 %v858
        %v1031 = vunpack.c.h.b16 %v858
        %v1032 = vunpack.c.l.b16 %v859
        %v1033 = vunpack.c.h.b16 %v859
        %v1034 = vunpack.c.l.b16 %v860
        %v1035 = vunpack.c.h.b16 %v860
        %v1036 = vunpack.c.l.b16 %v861
        %v1037 = vunpack.c.h.b16 %v861
        %v1038 = vunpack.c.l.b16 %v862
        %v1039 = vunpack.c.h.b16 %v862
        %v1040 = vunpack.c.l.b16 %v863
        %v1041 = vunpack.c.h.b16 %v863
        %v1042 = vunpack.c.l.b16 %v864
        %v1043 = vunpack.c.h.b16 %v864
        %v1044 = vunpack.c.l.b16 %v865
        %v1045 = vunpack.c.h.b16 %v865
        %v1046 = vunpack.c.l.b16 %v866
        %v1047 = vunpack.c.h.b16 %v866
        %v1048 = vunpack.c.l.b16 %v867
        %v1049 = vunpack.c.h.b16 %v867
        %v1050 = vunpack.c.l.b16 %v868
        %v1051 = vunpack.c.h.b16 %v868
        %v1052 = vunpack.c.l.b16 %v869
        %v1053 = vunpack.c.h.b16 %v869
        %v1054 = vunpack.c.l.b16 %v870
        %v1055 = vunpack.c.h.b16 %v870
        %v1056 = vunpack.c.l.b16 %v871
        %v1057 = vunpack.c.h.b16 %v871
        %v1058 = vunpack.c.l.b16 %v872
        %v1059 = vunpack.c.h.b16 %v872
        %v1060 = vunpack.c.l.b16 %v873
        %v1061 = vunpack.c.h.b16 %v873
        %v1062 = vunpack.c.l.b16 %v874
        %v1063 = vunpack.c.h.b16 %v874
        %v1064 = vunpack.c.l.b16 %v875
        %v1065 = vunpack.c.h.b16 %v875
        %v1066 = vunpack.c.l.b16 %v876
        %v1067 = vunpack.c.h.b16 %v876
        %v1068 = vunpack.c.l.b16 %v877
        %v1069 = vunpack.c.h.b16 %v877
        %v1070 = vunpack.c.l.b16 %v878
        %v1071 = vunpack.c.h.b16 %v878
        %v1072 = vunpack.c.l.b16 %v879
        %v1073 = vunpack.c.h.b16 %v879
        %v1074 = vunpack.c.l.b16 %v880
        %v1075 = vunpack.c.h.b16 %v880
        %v1076 = vunpack.c.l.b16 %v881
        %v1077 = vunpack.c.h.b16 %v881
        %v1078 = vunpack.c.l.b16 %v882
        %v1079 = vunpack.c.h.b16 %v882
        %v1080 = vunpack.c.l.b16 %v883
        %v1081 = vunpack.c.h.b16 %v883
        %v1082 = vunpack.c.l.b16 %v884
        %v1083 = vunpack.c.h.b16 %v884
        %v1084 = vunpack.c.l.b16 %v885
        %v1085 = vunpack.c.h.b16 %v885
        %v1086 = vunpack.c.l.b16 %v886
        %v1087 = vunpack.c.h.b16 %v886
        %v1088 = vunpack.c.l.b16 %v887
        %v1089 = vunpack.c.h.b16 %v887
        %v1090 = vunpack.c.l.b16 %v888
        %v1091 = vunpack.c.h.b16 %v888
        %v1092 = vunpack.c.l.b16 %v889
        %v1093 = vunpack.c.h.b16 %v889
        %v1094 = vunpack.c.l.b16 %v890
        %v1095 = vunpack.c.h.b16 %v890
        %v1096 = vunpack.c.l.b16 %v891
        %v1097 = vunpack.c.h.b16 %v891
        %v1098 = vunpack.c.l.b16 %v892
        %v1099 = vunpack.c.h.b16 %v892
        %v1100 = vunpack.c.l.b16 %v893
        %v1101 = vunpack.c.h.b16 %v893
        %v1102 = vunpack.c.l.b16 %v894
        %v1103 = vunpack.c.h.b16 %v894
        %v1104 = vunpack.c.l.b16 %v895
        %v1105 = vunpack.c.h.b16 %v895
        %v1106 = vunpack.c.l.b16 %v896
        %v1107 = vunpack.c.h.b16 %v896
        %v1108 = vunpack.c.l.b16 %v897
        %v1109 = vunpack.c.h.b16 %v897
        %v1110 = vunpack.c.l.b16 %v898
        %v1111 = vunpack.c.h.b16 %v898
        %v1112 = vunpack.c.l.b16 %v899
        %v1113 = vunpack.c.h.b16 %v899
        %v1114 = vunpack.c.l.b16 %v900
        %v1115 = vunpack.c.h.b16 %v900
        %v1116 = vunpack.c.l.b16 %v901
        %v1117 = vunpack.c.h.b16 %v901
        %v1118 = vunpack.c.l.b16 %v902
        %v1119 = vunpack.c.h.b16 %v902
        %v1120 = vunpack.c.l.b16 %v903
        %v1121 = vunpack.c.h.b16 %v903
        %v1122 = vunpack.c.l.b16 %v904
        %v1123 = vunpack.c.h.b16 %v904
        %v1124 = vunpack.c.l.b16 %v905
        %v1125 = vunpack.c.h.b16 %v905
        %v1126 = vunpack.c.l.b16 %v906
        %v1127 = vunpack.c.h.b16 %v906
        %v1128 = vunpack.c.l.b16 %v907
        %v1129 = vunpack.c.h.b16 %v907
        %v1130 = vunpack.c.l.b16 %v908
        %v1131 = vunpack.c.h.b16 %v908
        %v1132 = vunpack.c.l.b16 %v909
        %v1133 = vunpack.c.h.b16 %v909
        %v1134 = vunpack.c.l.b16 %v910
        %v1135 = vunpack.c.h.b16 %v910
        %v1136 = vunpack.c.l.b16 %v911
        %v1137 = vunpack.c.h.b16 %v911
        %v1138 = vunpack.c.l.b16 %v912
        %v1139 = vunpack.c.h.b16 %v912
        %v1140 = vunpack.c.l.b16 %v913
        %v1141 = vunpack.c.h.b16 %v913
        %v1142 = vunpack.c.l.b16 %v914
        %v1143 = vunpack.c.h.b16 %v914
        %v1144 = vunpack.c.l.b16 %v915
        %v1145 = vunpack.c.h.b16 %v915
        %v1146 = vunpack.c.l.b16 %v916
        %v1147 = vunpack.c.h.b16 %v916
        %v1148 = vunpack.c.l.b16 %v917
        %v1149 = vunpack.c.h.b16 %v917
        %v1150 = vunpack.c.l.b16 %v918
        %v1151 = vunpack.c.h.b16 %v918
        %v1152 = vunpack.c.l.b16 %v919
        %v1153 = vunpack.c.h.b16 %v919
        %v1154 = vpack.c.b16 %v1034, %v1026
        %v1155 = vpack.c.b16 %v1035, %v1027
        %v1156 = vpack.c.b16 %v1036, %v1028
        %v1157 = vpack.c.b16 %v1037, %v1029
        %v1158 = vpack.c.b16 %v1038, %v1030
        %v1159 = vpack.c.b16 %v1039, %v1031
        %v1160 = vpack.c.b16 %v1040, %v1032
        %v1161 = vpack.c.b16 %v1041, %v1033
        %v1162 = vpack.c.b16 %v1050, %v1042
        %v1163 = vpack.c.b16 %v1051, %v1043
        %v1164 = vpack.c.b16 %v1052, %v1044
        %v1165 = vpack.c.b16 %v1053, %v1045
        %v1166 = vpack.c.b16 %v1054, %v1046
        %v1167 = vpack.c.b16 %v1055, %v1047
        %v1168 = vpack.c.b16 %v1056, %v1048
        %v1169 = vpack.c.b16 %v1057, %v1049
        %v1170 = vpack.c.b16 %v1066, %v1058
        %v1171 = vpack.c.b16 %v1067, %v1059
        %v1172 = vpack.c.b16 %v1068, %v1060
        %v1173 = vpack.c.b16 %v1069, %v1061
        %v1174 = vpack.c.b16 %v1070, %v1062
        %v1175 = vpack.c.b16 %v1071, %v1063
        %v1176 = vpack.c.b16 %v1072, %v1064
        %v1177 = vpack.c.b16 %v1073, %v1065
        %v1178 = vpack.c.b16 %v1082, %v1074
        %v1179 = vpack.c.b16 %v1083, %v1075
        %v1180 = vpack.c.b16 %v1084, %v1076
        %v1181 = vpack.c.b16 %v1085, %v1077
        %v1182 = vpack.c.b16 %v1086, %v1078
        %v1183 = vpack.c.b16 %v1087, %v1079
        %v1184 = vpack.c.b16 %v1088, %v1080
        %v1185 = vpack.c.b16 %v1089, %v1081
        %v1186 = vpack.c.b16 %v1098, %v1090
        %v1187 = vpack.c.b16 %v1099, %v1091
        %v1188 = vpack.c.b16 %v1100, %v1092
        %v1189 = vpack.c.b16 %v1101, %v1093
        %v1190 = vpack.c.b16 %v1102, %v1094
        %v1191 = vpack.c.b16 %v1103, %v1095
        %v1192 = vpack.c.b16 %v1104, %v1096
        %v1193 = vpack.c.b16 %v1105, %v1097
        %v1194 = vpack.c.b16 %v1114, %v1106
        %v1195 = vpack.c.b16 %v1115, %v1107
        %v1196 = vpack.c.b16 %v1116, %v1108
        %v1197 = vpack.c.b16 %v1117, %v1109
        %v1198 = vpack.c.b16 %v1118, %v1110
        %v1199 = vpack.c.b16 %v1119, %v1111
        %v1200 = vpack.c.b16 %v1120, %v1112
        %v1201 = vpack.c.b16 %v1121, %v1113
        %v1202 = vpack.c.b16 %v1130, %v1122
        %v1203 = vpack.c.b16 %v1131, %v1123
        %v1204 = vpack.c.b16 %v1132, %v1124
        %v1205 = vpack.c.b16 %v1133, %v1125
        %v1206 = vpack.c.b16 %v1134, %v1126
        %v1207 = vpack.c.b16 %v1135, %v1127
        %v1208 = vpack.c.b16 %v1136, %v1128
        %v1209 = vpack.c.b16 %v1137, %v1129
        %v1210 = vpack.c.b16 %v1146, %v1138
        %v1211 = vpack.c.b16 %v1147, %v1139
        %v1212 = vpack.c.b16 %v1148, %v1140
        %v1213 = vpack.c.b16 %v1149, %v1141
        %v1214 = vpack.c.b16 %v1150, %v1142
        %v1215 = vpack.c.b16 %v1151, %v1143
        %v1216 = vpack.c.b16 %v1152, %v1144
        %v1217 = vpack.c.b16 %v1153, %v1145
        %1282 = vmatprep.subr.bf16.mxu0 %v1155
        %1283 = vmatpush1.bf16.msra.mxu0 %v1154
        %1284 = vmatprep.subr.bf16.mxu0 %v1163
        %1285 = vmatpush1.bf16.msra.mxu0 %v1162
        %1286 = vmatprep.subr.bf16.mxu0 %v1171
        %1287 = vmatpush1.bf16.msra.mxu0 %v1170
        %1288 = vmatprep.subr.bf16.mxu0 %v1179
        %1289 = vmatpush1.bf16.msra.mxu0 %v1178
        %1290 = vmatprep.subr.bf16.mxu0 %v1187
        %1291 = vmatpush1.bf16.msra.mxu0 %v1186
        %1292 = vmatprep.subr.bf16.mxu0 %v1195
        %1293 = vmatpush1.bf16.msra.mxu0 %v1194
        %1294 = vmatprep.subr.bf16.mxu0 %v1203
        %1295 = vmatpush1.bf16.msra.mxu0 %v1202
        %1296 = vmatprep.subr.bf16.mxu0 %v1211
        %1297 = vmatpush1.bf16.msra.mxu0 %v1210
        %1298 = vmatprep.subr.bf16.mxu0 0
        %1299 = vmatpush1.bf16.msra.mxu0 0
        %1300 = vmatprep.subr.bf16.mxu0 0
        %1301 = vmatpush1.bf16.msra.mxu0 0
        %1302 = vmatprep.subr.bf16.mxu0 0
        %1303 = vmatpush1.bf16.msra.mxu0 0
        %1304 = vmatprep.subr.bf16.mxu0 0
        %1305 = vmatpush1.bf16.msra.mxu0 0
        %1306 = vmatprep.subr.bf16.mxu0 0
        %1307 = vmatpush1.bf16.msra.mxu0 0
        %1308 = vmatprep.subr.bf16.mxu0 0
        %1309 = vmatpush1.bf16.msra.mxu0 0
        %1310 = vmatprep.subr.bf16.mxu0 0
        %1311 = vmatpush1.bf16.msra.mxu0 0
        %1312 = vmatprep.subr.bf16.mxu0 0
        %1313 = vmatpush1.bf16.msra.mxu0 0
        %1314 = vmatprep.mubr.bf16.mxu0 0
        %1315 = vmatmul.mubr.bf16.gmra.mrb[0].mxu0 %v846
        %v1316 = vpop.f32.mrb[0].mxu0
        %v1317 = vadd.f32 %v925, %v1316
        %v1318 = vpop.f32.mrb[0].mxu0
        %v1319 = vadd.f32 %v929, %v1318
        %v1320 = vpop.f32.mrb[0].mxu0
        %v1321 = vadd.f32 %v925, %v1320
        %v1322 = vpop.f32.mrb[0].mxu0
        %v1323 = vadd.f32 %v929, %v1322
        %1324 = vmatprep.mubr.bf16.mxu0 0
        %1325 = vmatmul.mubr.bf16.gmra.mrb[0].mxu0 %v847
        %v1326 = vpop.f32.mrb[0].mxu0
        %v1327 = vadd.f32 %v925, %v1326
        %v1328 = vpop.f32.mrb[0].mxu0
        %v1329 = vadd.f32 %v929, %v1328
        %v1330 = vpop.f32.mrb[0].mxu0
        %v1331 = vadd.f32 %v925, %v1330
        %v1332 = vpop.f32.mrb[0].mxu0
        %v1333 = vadd.f32 %v929, %v1332
        %1334 = vmatprep.mubr.bf16.mxu0 0
        %1335 = vmatmul.mubr.bf16.gmra.mrb[0].mxu0 %v848
        %v1336 = vpop.f32.mrb[0].mxu0
        %v1337 = vadd.f32 %v925, %v1336
        %v1338 = vpop.f32.mrb[0].mxu0
        %v1339 = vadd.f32 %v929, %v1338
        %v1340 = vpop.f32.mrb[0].mxu0
        %v1341 = vadd.f32 %v925, %v1340
        %v1342 = vpop.f32.mrb[0].mxu0
        %v1343 = vadd.f32 %v929, %v1342
        %1344 = vmatprep.mubr.bf16.mxu0 0
        %1345 = vmatmul.mubr.bf16.gmra.mrb[0].mxu0 %v849
        %v1346 = vpop.f32.mrb[0].mxu0
        %v1347 = vadd.f32 %v925, %v1346
        %v1348 = vpop.f32.mrb[0].mxu0
        %v1349 = vadd.f32 %v929, %v1348
        %v1350 = vpop.f32.mrb[0].mxu0
        %v1351 = vadd.f32 %v925, %v1350
        %v1352 = vpop.f32.mrb[0].mxu0
        %v1353 = vadd.f32 %v929, %v1352
        %1354 = vmatprep.mubr.bf16.mxu0 0
        %1355 = vmatmul.mubr.bf16.gmra.mrb[0].mxu0 %v850
        %v1356 = vpop.f32.mrb[0].mxu0
        %v1357 = vadd.f32 %v925, %v1356
        %v1358 = vpop.f32.mrb[0].mxu0
        %v1359 = vadd.f32 %v929, %v1358
        %v1360 = vpop.f32.mrb[0].mxu0
        %v1361 = vadd.f32 %v925, %v1360
        %v1362 = vpop.f32.mrb[0].mxu0
        %v1363 = vadd.f32 %v929, %v1362
        %1364 = vmatprep.mubr.bf16.mxu0 0
        %1365 = vmatmul.mubr.bf16.gmra.mrb[0].mxu0 %v851
        %v1366 = vpop.f32.mrb[0].mxu0
        %v1367 = vadd.f32 %v925, %v1366
        %v1368 = vpop.f32.mrb[0].mxu0
        %v1369 = vadd.f32 %v929, %v1368
        %v1370 = vpop.f32.mrb[0].mxu0
        %v1371 = vadd.f32 %v925, %v1370
        %v1372 = vpop.f32.mrb[0].mxu0
        %v1373 = vadd.f32 %v929, %v1372
        %1374 = vmatprep.mubr.bf16.mxu0 0
        %1375 = vmatmul.mubr.bf16.gmra.mrb[0].mxu0 %v852
        %v1376 = vpop.f32.mrb[0].mxu0
        %v1377 = vadd.f32 %v925, %v1376
        %v1378 = vpop.f32.mrb[0].mxu0
        %v1379 = vadd.f32 %v929, %v1378
        %v1380 = vpop.f32.mrb[0].mxu0
        %v1381 = vadd.f32 %v925, %v1380
        %v1382 = vpop.f32.mrb[0].mxu0
        %v1383 = vadd.f32 %v929, %v1382
        %1384 = vmatprep.mubr.bf16.mxu0 0
        %1385 = vmatmul.mubr.bf16.gmra.mrb[0].mxu0 %v853
        %v1386 = vpop.f32.mrb[0].mxu0
        %v1387 = vadd.f32 %v925, %v1386
        %v1388 = vpop.f32.mrb[0].mxu0
        %v1389 = vadd.f32 %v929, %v1388
        %v1390 = vpop.f32.mrb[0].mxu0
        %v1391 = vadd.f32 %v925, %v1390
        %v1392 = vpop.f32.mrb[0].mxu0
        %v1393 = vadd.f32 %v929, %v1392
        %1394 = vmatprep.mubr.bf16.mxu0 0
        %1395 = vmatmul.mubr.bf16.gmra.mrb[0].mxu0 %v854
        %v1396 = vpop.f32.mrb[0].mxu0
        %v1397 = vadd.f32 %v925, %v1396
        %v1398 = vpop.f32.mrb[0].mxu0
        %v1399 = vadd.f32 %v929, %v1398
        %v1400 = vpop.f32.mrb[0].mxu0
        %v1401 = vadd.f32 %v925, %v1400
        %v1402 = vpop.f32.mrb[0].mxu0
        %v1403 = vadd.f32 %v929, %v1402
        %1404 = vmatprep.mubr.bf16.mxu0 0
        %1405 = vmatmul.mubr.bf16.gmra.mrb[0].mxu0 %v855
        %v1406 = vpop.f32.mrb[0].mxu0
        %v1407 = vadd.f32 %v925, %v1406
        %v1408 = vpop.f32.mrb[0].mxu0
        %v1409 = vadd.f32 %v929, %v1408
        %v1410 = vpop.f32.mrb[0].mxu0
        %v1411 = vadd.f32 %v925, %v1410
        %v1412 = vpop.f32.mrb[0].mxu0
        %v1413 = vadd.f32 %v929, %v1412
        %1414 = vdwg.mxu0
        %1415 = vmatprep.subr.bf16.mxu0 %v1157
        %1416 = vmatpush1.bf16.msra.mxu0 %v1156
        %1417 = vmatprep.subr.bf16.mxu0 %v1165
        %1418 = vmatpush1.bf16.msra.mxu0 %v1164
        %1419 = vmatprep.subr.bf16.mxu0 %v1173
        %1420 = vmatpush1.bf16.msra.mxu0 %v1172
        %1421 = vmatprep.subr.bf16.mxu0 %v1181
        %1422 = vmatpush1.bf16.msra.mxu0 %v1180
        %1423 = vmatprep.subr.bf16.mxu0 %v1189
        %1424 = vmatpush1.bf16.msra.mxu0 %v1188
        %1425 = vmatprep.subr.bf16.mxu0 %v1197
        %1426 = vmatpush1.bf16.msra.mxu0 %v1196
        %1427 = vmatprep.subr.bf16.mxu0 %v1205
        %1428 = vmatpush1.bf16.msra.mxu0 %v1204
        %1429 = vmatprep.subr.bf16.mxu0 %v1213
        %1430 = vmatpush1.bf16.msra.mxu0 %v1212
        %1431 = vmatprep.subr.bf16.mxu0 0
        %1432 = vmatpush1.bf16.msra.mxu0 0
        %1433 = vmatprep.subr.bf16.mxu0 0
        %1434 = vmatpush1.bf16.msra.mxu0 0
        %1435 = vmatprep.subr.bf16.mxu0 0
        %1436 = vmatpush1.bf16.msra.mxu0 0
        %1437 = vmatprep.subr.bf16.mxu0 0
        %1438 = vmatpush1.bf16.msra.mxu0 0
        %1439 = vmatprep.subr.bf16.mxu0 0
        %1440 = vmatpush1.bf16.msra.mxu0 0
        %1441 = vmatprep.subr.bf16.mxu0 0
        %1442 = vmatpush1.bf16.msra.mxu0 0
        %1443 = vmatprep.subr.bf16.mxu0 0
        %1444 = vmatpush1.bf16.msra.mxu0 0
        %1445 = vmatprep.subr.bf16.mxu0 0
        %1446 = vmatpush1.bf16.msra.mxu0 0
        %1447 = vmatprep.mubr.bf16.mxu0 0
        %1448 = vmatmul.mubr.bf16.gmra.mrb[0].mxu0 %v846
        %v1449 = vpop.f32.mrb[0].mxu0
        %v1450 = vadd.f32 %v933, %v1449
        %v1451 = vpop.f32.mrb[0].mxu0
        %v1452 = vadd.f32 %v937, %v1451
        %v1453 = vpop.f32.mrb[0].mxu0
        %v1454 = vadd.f32 %v933, %v1453
        %v1455 = vpop.f32.mrb[0].mxu0
        %v1456 = vadd.f32 %v937, %v1455
        %1457 = vmatprep.mubr.bf16.mxu0 0
        %1458 = vmatmul.mubr.bf16.gmra.mrb[0].mxu0 %v847
        %v1459 = vpop.f32.mrb[0].mxu0
        %v1460 = vadd.f32 %v933, %v1459
        %v1461 = vpop.f32.mrb[0].mxu0
        %v1462 = vadd.f32 %v937, %v1461
        %v1463 = vpop.f32.mrb[0].mxu0
        %v1464 = vadd.f32 %v933, %v1463
        %v1465 = vpop.f32.mrb[0].mxu0
        %v1466 = vadd.f32 %v937, %v1465
        %1467 = vmatprep.mubr.bf16.mxu0 0
        %1468 = vmatmul.mubr.bf16.gmra.mrb[0].mxu0 %v848
        %v1469 = vpop.f32.mrb[0].mxu0
        %v1470 = vadd.f32 %v933, %v1469
        %v1471 = vpop.f32.mrb[0].mxu0
        %v1472 = vadd.f32 %v937, %v1471
        %v1473 = vpop.f32.mrb[0].mxu0
        %v1474 = vadd.f32 %v933, %v1473
        %v1475 = vpop.f32.mrb[0].mxu0
        %v1476 = vadd.f32 %v937, %v1475
        %1477 = vmatprep.mubr.bf16.mxu0 0
        %1478 = vmatmul.mubr.bf16.gmra.mrb[0].mxu0 %v849
        %v1479 = vpop.f32.mrb[0].mxu0
        %v1480 = vadd.f32 %v933, %v1479
        %v1481 = vpop.f32.mrb[0].mxu0
        %v1482 = vadd.f32 %v937, %v1481
        %v1483 = vpop.f32.mrb[0].mxu0
        %v1484 = vadd.f32 %v933, %v1483
        %v1485 = vpop.f32.mrb[0].mxu0
        %v1486 = vadd.f32 %v937, %v1485
        %1487 = vmatprep.mubr.bf16.mxu0 0
        %1488 = vmatmul.mubr.bf16.gmra.mrb[0].mxu0 %v850
        %v1489 = vpop.f32.mrb[0].mxu0
        %v1490 = vadd.f32 %v933, %v1489
        %v1491 = vpop.f32.mrb[0].mxu0
        %v1492 = vadd.f32 %v937, %v1491
        %v1493 = vpop.f32.mrb[0].mxu0
        %v1494 = vadd.f32 %v933, %v1493
        %v1495 = vpop.f32.mrb[0].mxu0
        %v1496 = vadd.f32 %v937, %v1495
        %1497 = vmatprep.mubr.bf16.mxu0 0
        %1498 = vmatmul.mubr.bf16.gmra.mrb[0].mxu0 %v851
        %v1499 = vpop.f32.mrb[0].mxu0
        %v1500 = vadd.f32 %v933, %v1499
        %v1501 = vpop.f32.mrb[0].mxu0
        %v1502 = vadd.f32 %v937, %v1501
        %v1503 = vpop.f32.mrb[0].mxu0
        %v1504 = vadd.f32 %v933, %v1503
        %v1505 = vpop.f32.mrb[0].mxu0
        %v1506 = vadd.f32 %v937, %v1505
        %1507 = vmatprep.mubr.bf16.mxu0 0
        %1508 = vmatmul.mubr.bf16.gmra.mrb[0].mxu0 %v852
        %v1509 = vpop.f32.mrb[0].mxu0
        %v1510 = vadd.f32 %v933, %v1509
        %v1511 = vpop.f32.mrb[0].mxu0
        %v1512 = vadd.f32 %v937, %v1511
        %v1513 = vpop.f32.mrb[0].mxu0
        %v1514 = vadd.f32 %v933, %v1513
        %v1515 = vpop.f32.mrb[0].mxu0
        %v1516 = vadd.f32 %v937, %v1515
        %1517 = vmatprep.mubr.bf16.mxu0 0
        %1518 = vmatmul.mubr.bf16.gmra.mrb[0].mxu0 %v853
        %v1519 = vpop.f32.mrb[0].mxu0
        %v1520 = vadd.f32 %v933, %v1519
        %v1521 = vpop.f32.mrb[0].mxu0
        %v1522 = vadd.f32 %v937, %v1521
        %v1523 = vpop.f32.mrb[0].mxu0
        %v1524 = vadd.f32 %v933, %v1523
        %v1525 = vpop.f32.mrb[0].mxu0
        %v1526 = vadd.f32 %v937, %v1525
        %1527 = vmatprep.mubr.bf16.mxu0 0
        %1528 = vmatmul.mubr.bf16.gmra.mrb[0].mxu0 %v854
        %v1529 = vpop.f32.mrb[0].mxu0
        %v1530 = vadd.f32 %v933, %v1529
        %v1531 = vpop.f32.mrb[0].mxu0
        %v1532 = vadd.f32 %v937, %v1531
        %v1533 = vpop.f32.mrb[0].mxu0
        %v1534 = vadd.f32 %v933, %v1533
        %v1535 = vpop.f32.mrb[0].mxu0
        %v1536 = vadd.f32 %v937, %v1535
        %1537 = vmatprep.mubr.bf16.mxu0 0
        %1538 = vmatmul.mubr.bf16.gmra.mrb[0].mxu0 %v855
        %v1539 = vpop.f32.mrb[0].mxu0
        %v1540 = vadd.f32 %v933, %v1539
        %v1541 = vpop.f32.mrb[0].mxu0
        %v1542 = vadd.f32 %v937, %v1541
        %v1543 = vpop.f32.mrb[0].mxu0
        %v1544 = vadd.f32 %v933, %v1543
        %v1545 = vpop.f32.mrb[0].mxu0
        %v1546 = vadd.f32 %v937, %v1545
        %1547 = vdwg.mxu0
        %1548 = vmatprep.subr.bf16.mxu0 %v1159
        %1549 = vmatpush1.bf16.msra.mxu0 %v1158
        %1550 = vmatprep.subr.bf16.mxu0 %v1167
        %1551 = vmatpush1.bf16.msra.mxu0 %v1166
        %1552 = vmatprep.subr.bf16.mxu0 %v1175
        %1553 = vmatpush1.bf16.msra.mxu0 %v1174
        %1554 = vmatprep.subr.bf16.mxu0 %v1183
        %1555 = vmatpush1.bf16.msra.mxu0 %v1182
        %1556 = vmatprep.subr.bf16.mxu0 %v1191
        %1557 = vmatpush1.bf16.msra.mxu0 %v1190
        %1558 = vmatprep.subr.bf16.mxu0 %v1199
        %1559 = vmatpush1.bf16.msra.mxu0 %v1198
        %1560 = vmatprep.subr.bf16.mxu0 %v1207
        %1561 = vmatpush1.bf16.msra.mxu0 %v1206
        %1562 = vmatprep.subr.bf16.mxu0 %v1215
        %1563 = vmatpush1.bf16.msra.mxu0 %v1214
        %1564 = vmatprep.subr.bf16.mxu0 0
        %1565 = vmatpush1.bf16.msra.mxu0 0
        %1566 = vmatprep.subr.bf16.mxu0 0
        %1567 = vmatpush1.bf16.msra.mxu0 0
        %1568 = vmatprep.subr.bf16.mxu0 0
        %1569 = vmatpush1.bf16.msra.mxu0 0
        %1570 = vmatprep.subr.bf16.mxu0 0
        %1571 = vmatpush1.bf16.msra.mxu0 0
        %1572 = vmatprep.subr.bf16.mxu0 0
        %1573 = vmatpush1.bf16.msra.mxu0 0
        %1574 = vmatprep.subr.bf16.mxu0 0
        %1575 = vmatpush1.bf16.msra.mxu0 0
        %1576 = vmatprep.subr.bf16.mxu0 0
        %1577 = vmatpush1.bf16.msra.mxu0 0
        %1578 = vmatprep.subr.bf16.mxu0 0
        %1579 = vmatpush1.bf16.msra.mxu0 0
        %1580 = vmatprep.mubr.bf16.mxu0 0
        %1581 = vmatmul.mubr.bf16.gmra.mrb[0].mxu0 %v846
        %v1582 = vpop.f32.mrb[0].mxu0
        %v1583 = vadd.f32 %v941, %v1582
        %v1584 = vpop.f32.mrb[0].mxu0
        %v1585 = vadd.f32 %v945, %v1584
        %v1586 = vpop.f32.mrb[0].mxu0
        %v1587 = vadd.f32 %v941, %v1586
        %v1588 = vpop.f32.mrb[0].mxu0
        %v1589 = vadd.f32 %v945, %v1588
        %1590 = vmatprep.mubr.bf16.mxu0 0
        %1591 = vmatmul.mubr.bf16.gmra.mrb[0].mxu0 %v847
        %v1592 = vpop.f32.mrb[0].mxu0
        %v1593 = vadd.f32 %v941, %v1592
        %v1594 = vpop.f32.mrb[0].mxu0
        %v1595 = vadd.f32 %v945, %v1594
        %v1596 = vpop.f32.mrb[0].mxu0
        %v1597 = vadd.f32 %v941, %v1596
        %v1598 = vpop.f32.mrb[0].mxu0
        %v1599 = vadd.f32 %v945, %v1598
        %1600 = vmatprep.mubr.bf16.mxu0 0
        %1601 = vmatmul.mubr.bf16.gmra.mrb[0].mxu0 %v848
        %v1602 = vpop.f32.mrb[0].mxu0
        %v1603 = vadd.f32 %v941, %v1602
        %v1604 = vpop.f32.mrb[0].mxu0
        %v1605 = vadd.f32 %v945, %v1604
        %v1606 = vpop.f32.mrb[0].mxu0
        %v1607 = vadd.f32 %v941, %v1606
        %v1608 = vpop.f32.mrb[0].mxu0
        %v1609 = vadd.f32 %v945, %v1608
        %1610 = vmatprep.mubr.bf16.mxu0 0
        %1611 = vmatmul.mubr.bf16.gmra.mrb[0].mxu0 %v849
        %v1612 = vpop.f32.mrb[0].mxu0
        %v1613 = vadd.f32 %v941, %v1612
        %v1614 = vpop.f32.mrb[0].mxu0
        %v1615 = vadd.f32 %v945, %v1614
        %v1616 = vpop.f32.mrb[0].mxu0
        %v1617 = vadd.f32 %v941, %v1616
        %v1618 = vpop.f32.mrb[0].mxu0
        %v1619 = vadd.f32 %v945, %v1618
        %1620 = vmatprep.mubr.bf16.mxu0 0
        %1621 = vmatmul.mubr.bf16.gmra.mrb[0].mxu0 %v850
        %v1622 = vpop.f32.mrb[0].mxu0
        %v1623 = vadd.f32 %v941, %v1622
        %v1624 = vpop.f32.mrb[0].mxu0
        %v1625 = vadd.f32 %v945, %v1624
        %v1626 = vpop.f32.mrb[0].mxu0
        %v1627 = vadd.f32 %v941, %v1626
        %v1628 = vpop.f32.mrb[0].mxu0
        %v1629 = vadd.f32 %v945, %v1628
        %1630 = vmatprep.mubr.bf16.mxu0 0
        %1631 = vmatmul.mubr.bf16.gmra.mrb[0].mxu0 %v851
        %v1632 = vpop.f32.mrb[0].mxu0
        %v1633 = vadd.f32 %v941, %v1632
        %v1634 = vpop.f32.mrb[0].mxu0
        %v1635 = vadd.f32 %v945, %v1634
        %v1636 = vpop.f32.mrb[0].mxu0
        %v1637 = vadd.f32 %v941, %v1636
        %v1638 = vpop.f32.mrb[0].mxu0
        %v1639 = vadd.f32 %v945, %v1638
        %1640 = vmatprep.mubr.bf16.mxu0 0
        %1641 = vmatmul.mubr.bf16.gmra.mrb[0].mxu0 %v852
        %v1642 = vpop.f32.mrb[0].mxu0
        %v1643 = vadd.f32 %v941, %v1642
        %v1644 = vpop.f32.mrb[0].mxu0
        %v1645 = vadd.f32 %v945, %v1644
        %v1646 = vpop.f32.mrb[0].mxu0
        %v1647 = vadd.f32 %v941, %v1646
        %v1648 = vpop.f32.mrb[0].mxu0
        %v1649 = vadd.f32 %v945, %v1648
        %1650 = vmatprep.mubr.bf16.mxu0 0
        %1651 = vmatmul.mubr.bf16.gmra.mrb[0].mxu0 %v853
        %v1652 = vpop.f32.mrb[0].mxu0
        %v1653 = vadd.f32 %v941, %v1652
        %v1654 = vpop.f32.mrb[0].mxu0
        %v1655 = vadd.f32 %v945, %v1654
        %v1656 = vpop.f32.mrb[0].mxu0
        %v1657 = vadd.f32 %v941, %v1656
        %v1658 = vpop.f32.mrb[0].mxu0
        %v1659 = vadd.f32 %v945, %v1658
        %1660 = vmatprep.mubr.bf16.mxu0 0
        %1661 = vmatmul.mubr.bf16.gmra.mrb[0].mxu0 %v854
        %v1662 = vpop.f32.mrb[0].mxu0
        %v1663 = vadd.f32 %v941, %v1662
        %v1664 = vpop.f32.mrb[0].mxu0
        %v1665 = vadd.f32 %v945, %v1664
        %v1666 = vpop.f32.mrb[0].mxu0
        %v1667 = vadd.f32 %v941, %v1666
        %v1668 = vpop.f32.mrb[0].mxu0
        %v1669 = vadd.f32 %v945, %v1668
        %1670 = vmatprep.mubr.bf16.mxu0 0
        %1671 = vmatmul.mubr.bf16.gmra.mrb[0].mxu0 %v855
        %v1672 = vpop.f32.mrb[0].mxu0
        %v1673 = vadd.f32 %v941, %v1672
        %v1674 = vpop.f32.mrb[0].mxu0
        %v1675 = vadd.f32 %v945, %v1674
        %v1676 = vpop.f32.mrb[0].mxu0
        %v1677 = vadd.f32 %v941, %v1676
        %v1678 = vpop.f32.mrb[0].mxu0
        %v1679 = vadd.f32 %v945, %v1678
        %1680 = vdwg.mxu0
        %1681 = vmatprep.subr.bf16.mxu0 %v1161
        %1682 = vmatpush1.bf16.msra.mxu0 %v1160
        %1683 = vmatprep.subr.bf16.mxu0 %v1169
        %1684 = vmatpush1.bf16.msra.mxu0 %v1168
        %1685 = vmatprep.subr.bf16.mxu0 %v1177
        %1686 = vmatpush1.bf16.msra.mxu0 %v1176
        %1687 = vmatprep.subr.bf16.mxu0 %v1185
        %1688 = vmatpush1.bf16.msra.mxu0 %v1184
        %1689 = vmatprep.subr.bf16.mxu0 %v1193
        %1690 = vmatpush1.bf16.msra.mxu0 %v1192
        %1691 = vmatprep.subr.bf16.mxu0 %v1201
        %1692 = vmatpush1.bf16.msra.mxu0 %v1200
        %1693 = vmatprep.subr.bf16.mxu0 %v1209
        %1694 = vmatpush1.bf16.msra.mxu0 %v1208
        %1695 = vmatprep.subr.bf16.mxu0 %v1217
        %1696 = vmatpush1.bf16.msra.mxu0 %v1216
        %1697 = vmatprep.subr.bf16.mxu0 0
        %1698 = vmatpush1.bf16.msra.mxu0 0
        %1699 = vmatprep.subr.bf16.mxu0 0
        %1700 = vmatpush1.bf16.msra.mxu0 0
        %1701 = vmatprep.subr.bf16.mxu0 0
        %1702 = vmatpush1.bf16.msra.mxu0 0
        %1703 = vmatprep.subr.bf16.mxu0 0
        %1704 = vmatpush1.bf16.msra.mxu0 0
        %1705 = vmatprep.subr.bf16.mxu0 0
        %1706 = vmatpush1.bf16.msra.mxu0 0
        %1707 = vmatprep.subr.bf16.mxu0 0
        %1708 = vmatpush1.bf16.msra.mxu0 0
        %1709 = vmatprep.subr.bf16.mxu0 0
        %1710 = vmatpush1.bf16.msra.mxu0 0
        %1711 = vmatprep.subr.bf16.mxu0 0
        %1712 = vmatpush1.bf16.msra.mxu0 0
        %1713 = vmatprep.mubr.bf16.mxu0 0
        %1714 = vmatmul.mubr.bf16.gmra.mrb[0].mxu0 %v846
        %v1715 = vpop.f32.mrb[0].mxu0
        %v1716 = vadd.f32 %v949, %v1715
        %v1717 = vpop.f32.mrb[0].mxu0
        %v1718 = vadd.f32 %v953, %v1717
        %v1719 = vpop.f32.mrb[0].mxu0
        %v1720 = vadd.f32 %v949, %v1719
        %v1721 = vpop.f32.mrb[0].mxu0
        %v1722 = vadd.f32 %v953, %v1721
        %1723 = vmatprep.mubr.bf16.mxu0 0
        %1724 = vmatmul.mubr.bf16.gmra.mrb[0].mxu0 %v847
        %v1725 = vpop.f32.mrb[0].mxu0
        %v1726 = vadd.f32 %v949, %v1725
        %v1727 = vpop.f32.mrb[0].mxu0
        %v1728 = vadd.f32 %v953, %v1727
        %v1729 = vpop.f32.mrb[0].mxu0
        %v1730 = vadd.f32 %v949, %v1729
        %v1731 = vpop.f32.mrb[0].mxu0
        %v1732 = vadd.f32 %v953, %v1731
        %1733 = vmatprep.mubr.bf16.mxu0 0
        %1734 = vmatmul.mubr.bf16.gmra.mrb[0].mxu0 %v848
        %v1735 = vpop.f32.mrb[0].mxu0
        %v1736 = vadd.f32 %v949, %v1735
        %v1737 = vpop.f32.mrb[0].mxu0
        %v1738 = vadd.f32 %v953, %v1737
        %v1739 = vpop.f32.mrb[0].mxu0
        %v1740 = vadd.f32 %v949, %v1739
        %v1741 = vpop.f32.mrb[0].mxu0
        %v1742 = vadd.f32 %v953, %v1741
        %1743 = vmatprep.mubr.bf16.mxu0 0
        %1744 = vmatmul.mubr.bf16.gmra.mrb[0].mxu0 %v849
        %v1745 = vpop.f32.mrb[0].mxu0
        %v1746 = vadd.f32 %v949, %v1745
        %v1747 = vpop.f32.mrb[0].mxu0
        %v1748 = vadd.f32 %v953, %v1747
        %v1749 = vpop.f32.mrb[0].mxu0
        %v1750 = vadd.f32 %v949, %v1749
        %v1751 = vpop.f32.mrb[0].mxu0
        %v1752 = vadd.f32 %v953, %v1751
        %1753 = vmatprep.mubr.bf16.mxu0 0
        %1754 = vmatmul.mubr.bf16.gmra.mrb[0].mxu0 %v850
        %v1755 = vpop.f32.mrb[0].mxu0
        %v1756 = vadd.f32 %v949, %v1755
        %v1757 = vpop.f32.mrb[0].mxu0
        %v1758 = vadd.f32 %v953, %v1757
        %v1759 = vpop.f32.mrb[0].mxu0
        %v1760 = vadd.f32 %v949, %v1759
        %v1761 = vpop.f32.mrb[0].mxu0
        %v1762 = vadd.f32 %v953, %v1761
        %1763 = vmatprep.mubr.bf16.mxu0 0
        %1764 = vmatmul.mubr.bf16.gmra.mrb[0].mxu0 %v851
        %v1765 = vpop.f32.mrb[0].mxu0
        %v1766 = vadd.f32 %v949, %v1765
        %v1767 = vpop.f32.mrb[0].mxu0
        %v1768 = vadd.f32 %v953, %v1767
        %v1769 = vpop.f32.mrb[0].mxu0
        %v1770 = vadd.f32 %v949, %v1769
        %v1771 = vpop.f32.mrb[0].mxu0
        %v1772 = vadd.f32 %v953, %v1771
        %1773 = vmatprep.mubr.bf16.mxu0 0
        %1774 = vmatmul.mubr.bf16.gmra.mrb[0].mxu0 %v852
        %v1775 = vpop.f32.mrb[0].mxu0
        %v1776 = vadd.f32 %v949, %v1775
        %v1777 = vpop.f32.mrb[0].mxu0
        %v1778 = vadd.f32 %v953, %v1777
        %v1779 = vpop.f32.mrb[0].mxu0
        %v1780 = vadd.f32 %v949, %v1779
        %v1781 = vpop.f32.mrb[0].mxu0
        %v1782 = vadd.f32 %v953, %v1781
        %1783 = vmatprep.mubr.bf16.mxu0 0
        %1784 = vmatmul.mubr.bf16.gmra.mrb[0].mxu0 %v853
        %v1785 = vpop.f32.mrb[0].mxu0
        %v1786 = vadd.f32 %v949, %v1785
        %v1787 = vpop.f32.mrb[0].mxu0
        %v1788 = vadd.f32 %v953, %v1787
        %v1789 = vpop.f32.mrb[0].mxu0
        %v1790 = vadd.f32 %v949, %v1789
        %v1791 = vpop.f32.mrb[0].mxu0
        %v1792 = vadd.f32 %v953, %v1791
        %1793 = vmatprep.mubr.bf16.mxu0 0
        %1794 = vmatmul.mubr.bf16.gmra.mrb[0].mxu0 %v854
        %v1795 = vpop.f32.mrb[0].mxu0
        %v1796 = vadd.f32 %v949, %v1795
        %v1797 = vpop.f32.mrb[0].mxu0
        %v1798 = vadd.f32 %v953, %v1797
        %v1799 = vpop.f32.mrb[0].mxu0
        %v1800 = vadd.f32 %v949, %v1799
        %v1801 = vpop.f32.mrb[0].mxu0
        %v1802 = vadd.f32 %v953, %v1801
        %1803 = vmatprep.mubr.bf16.mxu0 0
        %1804 = vmatmul.mubr.bf16.gmra.mrb[0].mxu0 %v855
        %v1805 = vpop.f32.mrb[0].mxu0
        %v1806 = vadd.f32 %v949, %v1805
        %v1807 = vpop.f32.mrb[0].mxu0
        %v1808 = vadd.f32 %v953, %v1807
        %v1809 = vpop.f32.mrb[0].mxu0
        %v1810 = vadd.f32 %v949, %v1809
        %v1811 = vpop.f32.mrb[0].mxu0
        %v1812 = vadd.f32 %v953, %v1811
        %1813 = vdwg.mxu0
        %v1814 = vmax.f32 %v1317, 0.0
        %v1815 = vmax.f32 %v1319, 0.0
        %v1816 = vmax.f32 %v1450, 0.0
        %v1817 = vmax.f32 %v1452, 0.0
        %v1818 = vmax.f32 %v1583, 0.0
        %v1819 = vmax.f32 %v1585, 0.0
        %v1820 = vmax.f32 %v1716, 0.0
        %v1821 = vmax.f32 %v1718, 0.0
        %v1822 = vmax.f32 %v1321, 0.0
        %v1823 = vmax.f32 %v1323, 0.0
        %v1824 = vmax.f32 %v1454, 0.0
        %v1825 = vmax.f32 %v1456, 0.0
        %v1826 = vmax.f32 %v1587, 0.0
        %v1827 = vmax.f32 %v1589, 0.0
        %v1828 = vmax.f32 %v1720, 0.0
        %v1829 = vmax.f32 %v1722, 0.0
        %v1830 = vmax.f32 %v1327, 0.0
        %v1831 = vmax.f32 %v1329, 0.0
        %v1832 = vmax.f32 %v1460, 0.0
        %v1833 = vmax.f32 %v1462, 0.0
        %v1834 = vmax.f32 %v1593, 0.0
        %v1835 = vmax.f32 %v1595, 0.0
        %v1836 = vmax.f32 %v1726, 0.0
        %v1837 = vmax.f32 %v1728, 0.0
        %v1838 = vmax.f32 %v1331, 0.0
        %v1839 = vmax.f32 %v1333, 0.0
        %v1840 = vmax.f32 %v1464, 0.0
        %v1841 = vmax.f32 %v1466, 0.0
        %v1842 = vmax.f32 %v1597, 0.0
        %v1843 = vmax.f32 %v1599, 0.0
        %v1844 = vmax.f32 %v1730, 0.0
        %v1845 = vmax.f32 %v1732, 0.0
        %v1846 = vmax.f32 %v1337, 0.0
        %v1847 = vmax.f32 %v1339, 0.0
        %v1848 = vmax.f32 %v1470, 0.0
        %v1849 = vmax.f32 %v1472, 0.0
        %v1850 = vmax.f32 %v1603, 0.0
        %v1851 = vmax.f32 %v1605, 0.0
        %v1852 = vmax.f32 %v1736, 0.0
        %v1853 = vmax.f32 %v1738, 0.0
        %v1854 = vmax.f32 %v1341, 0.0
        %v1855 = vmax.f32 %v1343, 0.0
        %v1856 = vmax.f32 %v1474, 0.0
        %v1857 = vmax.f32 %v1476, 0.0
        %v1858 = vmax.f32 %v1607, 0.0
        %v1859 = vmax.f32 %v1609, 0.0
        %v1860 = vmax.f32 %v1740, 0.0
        %v1861 = vmax.f32 %v1742, 0.0
        %v1862 = vmax.f32 %v1347, 0.0
        %v1863 = vmax.f32 %v1349, 0.0
        %v1864 = vmax.f32 %v1480, 0.0
        %v1865 = vmax.f32 %v1482, 0.0
        %v1866 = vmax.f32 %v1613, 0.0
        %v1867 = vmax.f32 %v1615, 0.0
        %v1868 = vmax.f32 %v1746, 0.0
        %v1869 = vmax.f32 %v1748, 0.0
        %v1870 = vmax.f32 %v1351, 0.0
        %v1871 = vmax.f32 %v1353, 0.0
        %v1872 = vmax.f32 %v1484, 0.0
        %v1873 = vmax.f32 %v1486, 0.0
        %v1874 = vmax.f32 %v1617, 0.0
        %v1875 = vmax.f32 %v1619, 0.0
        %v1876 = vmax.f32 %v1750, 0.0
        %v1877 = vmax.f32 %v1752, 0.0
        %v1878 = vmax.f32 %v1357, 0.0
        %v1879 = vmax.f32 %v1359, 0.0
        %v1880 = vmax.f32 %v1490, 0.0
        %v1881 = vmax.f32 %v1492, 0.0
        %v1882 = vmax.f32 %v1623, 0.0
        %v1883 = vmax.f32 %v1625, 0.0
        %v1884 = vmax.f32 %v1756, 0.0
        %v1885 = vmax.f32 %v1758, 0.0
        %v1886 = vmax.f32 %v1361, 0.0
        %v1887 = vmax.f32 %v1363, 0.0
        %v1888 = vmax.f32 %v1494, 0.0
        %v1889 = vmax.f32 %v1496, 0.0
        %v1890 = vmax.f32 %v1627, 0.0
        %v1891 = vmax.f32 %v1629, 0.0
        %v1892 = vmax.f32 %v1760, 0.0
        %v1893 = vmax.f32 %v1762, 0.0
        %v1894 = vmax.f32 %v1367, 0.0
        %v1895 = vmax.f32 %v1369, 0.0
        %v1896 = vmax.f32 %v1500, 0.0
        %v1897 = vmax.f32 %v1502, 0.0
        %v1898 = vmax.f32 %v1633, 0.0
        %v1899 = vmax.f32 %v1635, 0.0
        %v1900 = vmax.f32 %v1766, 0.0
        %v1901 = vmax.f32 %v1768, 0.0
        %v1902 = vmax.f32 %v1371, 0.0
        %v1903 = vmax.f32 %v1373, 0.0
        %v1904 = vmax.f32 %v1504, 0.0
        %v1905 = vmax.f32 %v1506, 0.0
        %v1906 = vmax.f32 %v1637, 0.0
        %v1907 = vmax.f32 %v1639, 0.0
        %v1908 = vmax.f32 %v1770, 0.0
        %v1909 = vmax.f32 %v1772, 0.0
        %v1910 = vmax.f32 %v1377, 0.0
        %v1911 = vmax.f32 %v1379, 0.0
        %v1912 = vmax.f32 %v1510, 0.0
        %v1913 = vmax.f32 %v1512, 0.0
        %v1914 = vmax.f32 %v1643, 0.0
        %v1915 = vmax.f32 %v1645, 0.0
        %v1916 = vmax.f32 %v1776, 0.0
        %v1917 = vmax.f32 %v1778, 0.0
        %v1918 = vmax.f32 %v1381, 0.0
        %v1919 = vmax.f32 %v1383, 0.0
        %v1920 = vmax.f32 %v1514, 0.0
        %v1921 = vmax.f32 %v1516, 0.0
        %v1922 = vmax.f32 %v1647, 0.0
        %v1923 = vmax.f32 %v1649, 0.0
        %v1924 = vmax.f32 %v1780, 0.0
        %v1925 = vmax.f32 %v1782, 0.0
        %v1926 = vmax.f32 %v1387, 0.0
        %v1927 = vmax.f32 %v1389, 0.0
        %v1928 = vmax.f32 %v1520, 0.0
        %v1929 = vmax.f32 %v1522, 0.0
        %v1930 = vmax.f32 %v1653, 0.0
        %v1931 = vmax.f32 %v1655, 0.0
        %v1932 = vmax.f32 %v1786, 0.0
        %v1933 = vmax.f32 %v1788, 0.0
        %v1934 = vmax.f32 %v1391, 0.0
        %v1935 = vmax.f32 %v1393, 0.0
        %v1936 = vmax.f32 %v1524, 0.0
        %v1937 = vmax.f32 %v1526, 0.0
        %v1938 = vmax.f32 %v1657, 0.0
        %v1939 = vmax.f32 %v1659, 0.0
        %v1940 = vmax.f32 %v1790, 0.0
        %v1941 = vmax.f32 %v1792, 0.0
        %v1942 = vmax.f32 %v1397, 0.0
        %v1943 = vmax.f32 %v1399, 0.0
        %v1944 = vmax.f32 %v1530, 0.0
        %v1945 = vmax.f32 %v1532, 0.0
        %v1946 = vmax.f32 %v1663, 0.0
        %v1947 = vmax.f32 %v1665, 0.0
        %v1948 = vmax.f32 %v1796, 0.0
        %v1949 = vmax.f32 %v1798, 0.0
        %v1950 = vmax.f32 %v1401, 0.0
        %v1951 = vmax.f32 %v1403, 0.0
        %v1952 = vmax.f32 %v1534, 0.0
        %v1953 = vmax.f32 %v1536, 0.0
        %v1954 = vmax.f32 %v1667, 0.0
        %v1955 = vmax.f32 %v1669, 0.0
        %v1956 = vmax.f32 %v1800, 0.0
        %v1957 = vmax.f32 %v1802, 0.0
        %v1958 = vmax.f32 %v1407, 0.0
        %v1959 = vmax.f32 %v1409, 0.0
        %v1960 = vmax.f32 %v1540, 0.0
        %v1961 = vmax.f32 %v1542, 0.0
        %v1962 = vmax.f32 %v1673, 0.0
        %v1963 = vmax.f32 %v1675, 0.0
        %v1964 = vmax.f32 %v1806, 0.0
        %v1965 = vmax.f32 %v1808, 0.0
        %v1966 = vmax.f32 %v1411, 0.0
        %v1967 = vmax.f32 %v1413, 0.0
        %v1968 = vmax.f32 %v1544, 0.0
        %v1969 = vmax.f32 %v1546, 0.0
        %v1970 = vmax.f32 %v1677, 0.0
        %v1971 = vmax.f32 %v1679, 0.0
        %v1972 = vmax.f32 %v1810, 0.0
        %v1973 = vmax.f32 %v1812, 0.0
        %s1974 = sadd.s32 %s29, %s30
        %s1975 = smul.u32 %s1974, 160
        %v1976 = vlaneseq
        %v1977 = vshrl.u32 %v1976, 7
        %v1978 = vadd.s32 %v1977, 8
        %v1979 = vadd.s32 %v1977, 16
        %v1980 = vadd.s32 %v1977, 24
        %v1981 = vadd.s32 %v1977, 32
        %v1982 = vadd.s32 %v1977, 40
        %v1983 = vadd.s32 %v1977, 48
        %v1984 = vadd.s32 %v1977, 56
        %v1985 = vadd.s32 %v1977, 64
        %v1986 = vadd.s32 %v1977, 72
        %v1987 = vadd.s32 %v1977, 80
        %v1988 = vadd.s32 %v1977, 88
        %v1989 = vadd.s32 %v1977, 96
        %v1990 = vadd.s32 %v1977, 104
        %v1991 = vadd.s32 %v1977, 112
        %v1992 = vadd.s32 %v1977, 120
        %v1993 = vadd.s32 %v1977, 128
        %v1994 = vadd.s32 %v1977, 136
        %v1995 = vadd.s32 %v1977, 144
        %v1996 = vadd.s32 %v1977, 152
        %v1997 = vstv %s1975
        %v1998 = vadd.s32 %v1997, %v1977
        %v1999 = vadd.s32 %v1997, %v1978
        %v2000 = vadd.s32 %v1997, %v1979
        %v2001 = vadd.s32 %v1997, %v1980
        %v2002 = vadd.s32 %v1997, %v1981
        %v2003 = vadd.s32 %v1997, %v1982
        %v2004 = vadd.s32 %v1997, %v1983
        %v2005 = vadd.s32 %v1997, %v1984
        %v2006 = vadd.s32 %v1997, %v1985
        %v2007 = vadd.s32 %v1997, %v1986
        %v2008 = vadd.s32 %v1997, %v1987
        %v2009 = vadd.s32 %v1997, %v1988
        %v2010 = vadd.s32 %v1997, %v1989
        %v2011 = vadd.s32 %v1997, %v1990
        %v2012 = vadd.s32 %v1997, %v1991
        %v2013 = vadd.s32 %v1997, %v1992
        %v2014 = vadd.s32 %v1997, %v1993
        %v2015 = vadd.s32 %v1997, %v1994
        %v2016 = vadd.s32 %v1997, %v1995
        %v2017 = vadd.s32 %v1997, %v1996
        %vm2018 = vcmp.lt.s32.totalorder %v1998, 300
        %vm2019 = vcmp.lt.s32.totalorder %v1999, 300
        %vm2020 = vcmp.lt.s32.totalorder %v2000, 300
        %vm2021 = vcmp.lt.s32.totalorder %v2001, 300
        %vm2022 = vcmp.lt.s32.totalorder %v2002, 300
        %vm2023 = vcmp.lt.s32.totalorder %v2003, 300
        %vm2024 = vcmp.lt.s32.totalorder %v2004, 300
        %vm2025 = vcmp.lt.s32.totalorder %v2005, 300
        %vm2026 = vcmp.lt.s32.totalorder %v2006, 300
        %vm2027 = vcmp.lt.s32.totalorder %v2007, 300
        %vm2028 = vcmp.lt.s32.totalorder %v2008, 300
        %vm2029 = vcmp.lt.s32.totalorder %v2009, 300
        %vm2030 = vcmp.lt.s32.totalorder %v2010, 300
        %vm2031 = vcmp.lt.s32.totalorder %v2011, 300
        %vm2032 = vcmp.lt.s32.totalorder %v2012, 300
        %vm2033 = vcmp.lt.s32.totalorder %v2013, 300
        %vm2034 = vcmp.lt.s32.totalorder %v2014, 300
        %vm2035 = vcmp.lt.s32.totalorder %v2015, 300
        %vm2036 = vcmp.lt.s32.totalorder %v2016, 300
        %vm2037 = vcmp.lt.s32.totalorder %v2017, 300
        %v2038 = vsel %vm2018, 1, 0
        %v2039 = vsel %vm2019, 1, 0
        %v2040 = vsel %vm2020, 1, 0
        %v2041 = vsel %vm2021, 1, 0
        %v2042 = vsel %vm2022, 1, 0
        %v2043 = vsel %vm2023, 1, 0
        %v2044 = vsel %vm2024, 1, 0
        %v2045 = vsel %vm2025, 1, 0
        %v2046 = vsel %vm2026, 1, 0
        %v2047 = vsel %vm2027, 1, 0
        %v2048 = vsel %vm2028, 1, 0
        %v2049 = vsel %vm2029, 1, 0
        %v2050 = vsel %vm2030, 1, 0
        %v2051 = vsel %vm2031, 1, 0
        %v2052 = vsel %vm2032, 1, 0
        %v2053 = vsel %vm2033, 1, 0
        %v2054 = vsel %vm2034, 1, 0
        %v2055 = vsel %vm2035, 1, 0
        %v2056 = vsel %vm2036, 1, 0
        %v2057 = vsel %vm2037, 1, 0
        %vm2058 = vcmp.eq.s32.totalorder %v2038, 1
        %vm2059 = vcmp.eq.s32.totalorder %v2039, 1
        %vm2060 = vcmp.eq.s32.totalorder %v2040, 1
        %vm2061 = vcmp.eq.s32.totalorder %v2041, 1
        %vm2062 = vcmp.eq.s32.totalorder %v2042, 1
        %vm2063 = vcmp.eq.s32.totalorder %v2043, 1
        %vm2064 = vcmp.eq.s32.totalorder %v2044, 1
        %vm2065 = vcmp.eq.s32.totalorder %v2045, 1
        %vm2066 = vcmp.eq.s32.totalorder %v2046, 1
        %vm2067 = vcmp.eq.s32.totalorder %v2047, 1
        %vm2068 = vcmp.eq.s32.totalorder %v2048, 1
        %vm2069 = vcmp.eq.s32.totalorder %v2049, 1
        %vm2070 = vcmp.eq.s32.totalorder %v2050, 1
        %vm2071 = vcmp.eq.s32.totalorder %v2051, 1
        %vm2072 = vcmp.eq.s32.totalorder %v2052, 1
        %vm2073 = vcmp.eq.s32.totalorder %v2053, 1
        %vm2074 = vcmp.eq.s32.totalorder %v2054, 1
        %vm2075 = vcmp.eq.s32.totalorder %v2055, 1
        %vm2076 = vcmp.eq.s32.totalorder %v2056, 1
        %vm2077 = vcmp.eq.s32.totalorder %v2057, 1
        %v2078 = vsel %vm2058, %v1814, 0.0
        %v2079 = vsel %vm2058, %v1815, 0.0
        %v2080 = vsel %vm2058, %v1816, 0.0
        %v2081 = vsel %vm2058, %v1817, 0.0
        %v2082 = vsel %vm2058, %v1818, 0.0
        %v2083 = vsel %vm2058, %v1819, 0.0
        %v2084 = vsel %vm2058, %v1820, 0.0
        %v2085 = vsel %vm2058, %v1821, 0.0
        %v2086 = vsel %vm2059, %v1822, 0.0
        %v2087 = vsel %vm2059, %v1823, 0.0
        %v2088 = vsel %vm2059, %v1824, 0.0
        %v2089 = vsel %vm2059, %v1825, 0.0
        %v2090 = vsel %vm2059, %v1826, 0.0
        %v2091 = vsel %vm2059, %v1827, 0.0
        %v2092 = vsel %vm2059, %v1828, 0.0
        %v2093 = vsel %vm2059, %v1829, 0.0
        %v2094 = vsel %vm2060, %v1830, 0.0
        %v2095 = vsel %vm2060, %v1831, 0.0
        %v2096 = vsel %vm2060, %v1832, 0.0
        %v2097 = vsel %vm2060, %v1833, 0.0
        %v2098 = vsel %vm2060, %v1834, 0.0
        %v2099 = vsel %vm2060, %v1835, 0.0
        %v2100 = vsel %vm2060, %v1836, 0.0
        %v2101 = vsel %vm2060, %v1837, 0.0
        %v2102 = vsel %vm2061, %v1838, 0.0
        %v2103 = vsel %vm2061, %v1839, 0.0
        %v2104 = vsel %vm2061, %v1840, 0.0
        %v2105 = vsel %vm2061, %v1841, 0.0
        %v2106 = vsel %vm2061, %v1842, 0.0
        %v2107 = vsel %vm2061, %v1843, 0.0
        %v2108 = vsel %vm2061, %v1844, 0.0
        %v2109 = vsel %vm2061, %v1845, 0.0
        %v2110 = vsel %vm2062, %v1846, 0.0
        %v2111 = vsel %vm2062, %v1847, 0.0
        %v2112 = vsel %vm2062, %v1848, 0.0
        %v2113 = vsel %vm2062, %v1849, 0.0
        %v2114 = vsel %vm2062, %v1850, 0.0
        %v2115 = vsel %vm2062, %v1851, 0.0
        %v2116 = vsel %vm2062, %v1852, 0.0
        %v2117 = vsel %vm2062, %v1853, 0.0
        %v2118 = vsel %vm2063, %v1854, 0.0
        %v2119 = vsel %vm2063, %v1855, 0.0
        %v2120 = vsel %vm2063, %v1856, 0.0
        %v2121 = vsel %vm2063, %v1857, 0.0
        %v2122 = vsel %vm2063, %v1858, 0.0
        %v2123 = vsel %vm2063, %v1859, 0.0
        %v2124 = vsel %vm2063, %v1860, 0.0
        %v2125 = vsel %vm2063, %v1861, 0.0
        %v2126 = vsel %vm2064, %v1862, 0.0
        %v2127 = vsel %vm2064, %v1863, 0.0
        %v2128 = vsel %vm2064, %v1864, 0.0
        %v2129 = vsel %vm2064, %v1865, 0.0
        %v2130 = vsel %vm2064, %v1866, 0.0
        %v2131 = vsel %vm2064, %v1867, 0.0
        %v2132 = vsel %vm2064, %v1868, 0.0
        %v2133 = vsel %vm2064, %v1869, 0.0
        %v2134 = vsel %vm2065, %v1870, 0.0
        %v2135 = vsel %vm2065, %v1871, 0.0
        %v2136 = vsel %vm2065, %v1872, 0.0
        %v2137 = vsel %vm2065, %v1873, 0.0
        %v2138 = vsel %vm2065, %v1874, 0.0
        %v2139 = vsel %vm2065, %v1875, 0.0
        %v2140 = vsel %vm2065, %v1876, 0.0
        %v2141 = vsel %vm2065, %v1877, 0.0
        %v2142 = vsel %vm2066, %v1878, 0.0
        %v2143 = vsel %vm2066, %v1879, 0.0
        %v2144 = vsel %vm2066, %v1880, 0.0
        %v2145 = vsel %vm2066, %v1881, 0.0
        %v2146 = vsel %vm2066, %v1882, 0.0
        %v2147 = vsel %vm2066, %v1883, 0.0
        %v2148 = vsel %vm2066, %v1884, 0.0
        %v2149 = vsel %vm2066, %v1885, 0.0
        %v2150 = vsel %vm2067, %v1886, 0.0
        %v2151 = vsel %vm2067, %v1887, 0.0
        %v2152 = vsel %vm2067, %v1888, 0.0
        %v2153 = vsel %vm2067, %v1889, 0.0
        %v2154 = vsel %vm2067, %v1890, 0.0
        %v2155 = vsel %vm2067, %v1891, 0.0
        %v2156 = vsel %vm2067, %v1892, 0.0
        %v2157 = vsel %vm2067, %v1893, 0.0
        %v2158 = vsel %vm2068, %v1894, 0.0
        %v2159 = vsel %vm2068, %v1895, 0.0
        %v2160 = vsel %vm2068, %v1896, 0.0
        %v2161 = vsel %vm2068, %v1897, 0.0
        %v2162 = vsel %vm2068, %v1898, 0.0
        %v2163 = vsel %vm2068, %v1899, 0.0
        %v2164 = vsel %vm2068, %v1900, 0.0
        %v2165 = vsel %vm2068, %v1901, 0.0
        %v2166 = vsel %vm2069, %v1902, 0.0
        %v2167 = vsel %vm2069, %v1903, 0.0
        %v2168 = vsel %vm2069, %v1904, 0.0
        %v2169 = vsel %vm2069, %v1905, 0.0
        %v2170 = vsel %vm2069, %v1906, 0.0
        %v2171 = vsel %vm2069, %v1907, 0.0
        %v2172 = vsel %vm2069, %v1908, 0.0
        %v2173 = vsel %vm2069, %v1909, 0.0
        %v2174 = vsel %vm2070, %v1910, 0.0
        %v2175 = vsel %vm2070, %v1911, 0.0
        %v2176 = vsel %vm2070, %v1912, 0.0
        %v2177 = vsel %vm2070, %v1913, 0.0
        %v2178 = vsel %vm2070, %v1914, 0.0
        %v2179 = vsel %vm2070, %v1915, 0.0
        %v2180 = vsel %vm2070, %v1916, 0.0
        %v2181 = vsel %vm2070, %v1917, 0.0
        %v2182 = vsel %vm2071, %v1918, 0.0
        %v2183 = vsel %vm2071, %v1919, 0.0
        %v2184 = vsel %vm2071, %v1920, 0.0
        %v2185 = vsel %vm2071, %v1921, 0.0
        %v2186 = vsel %vm2071, %v1922, 0.0
        %v2187 = vsel %vm2071, %v1923, 0.0
        %v2188 = vsel %vm2071, %v1924, 0.0
        %v2189 = vsel %vm2071, %v1925, 0.0
        %v2190 = vsel %vm2072, %v1926, 0.0
        %v2191 = vsel %vm2072, %v1927, 0.0
        %v2192 = vsel %vm2072, %v1928, 0.0
        %v2193 = vsel %vm2072, %v1929, 0.0
        %v2194 = vsel %vm2072, %v1930, 0.0
        %v2195 = vsel %vm2072, %v1931, 0.0
        %v2196 = vsel %vm2072, %v1932, 0.0
        %v2197 = vsel %vm2072, %v1933, 0.0
        %v2198 = vsel %vm2073, %v1934, 0.0
        %v2199 = vsel %vm2073, %v1935, 0.0
        %v2200 = vsel %vm2073, %v1936, 0.0
        %v2201 = vsel %vm2073, %v1937, 0.0
        %v2202 = vsel %vm2073, %v1938, 0.0
        %v2203 = vsel %vm2073, %v1939, 0.0
        %v2204 = vsel %vm2073, %v1940, 0.0
        %v2205 = vsel %vm2073, %v1941, 0.0
        %v2206 = vsel %vm2074, %v1942, 0.0
        %v2207 = vsel %vm2074, %v1943, 0.0
        %v2208 = vsel %vm2074, %v1944, 0.0
        %v2209 = vsel %vm2074, %v1945, 0.0
        %v2210 = vsel %vm2074, %v1946, 0.0
        %v2211 = vsel %vm2074, %v1947, 0.0
        %v2212 = vsel %vm2074, %v1948, 0.0
        %v2213 = vsel %vm2074, %v1949, 0.0
        %v2214 = vsel %vm2075, %v1950, 0.0
        %v2215 = vsel %vm2075, %v1951, 0.0
        %v2216 = vsel %vm2075, %v1952, 0.0
        %v2217 = vsel %vm2075, %v1953, 0.0
        %v2218 = vsel %vm2075, %v1954, 0.0
        %v2219 = vsel %vm2075, %v1955, 0.0
        %v2220 = vsel %vm2075, %v1956, 0.0
        %v2221 = vsel %vm2075, %v1957, 0.0
        %v2222 = vsel %vm2076, %v1958, 0.0
        %v2223 = vsel %vm2076, %v1959, 0.0
        %v2224 = vsel %vm2076, %v1960, 0.0
        %v2225 = vsel %vm2076, %v1961, 0.0
        %v2226 = vsel %vm2076, %v1962, 0.0
        %v2227 = vsel %vm2076, %v1963, 0.0
        %v2228 = vsel %vm2076, %v1964, 0.0
        %v2229 = vsel %vm2076, %v1965, 0.0
        %v2230 = vsel %vm2077, %v1966, 0.0
        %v2231 = vsel %vm2077, %v1967, 0.0
        %v2232 = vsel %vm2077, %v1968, 0.0
        %v2233 = vsel %vm2077, %v1969, 0.0
        %v2234 = vsel %vm2077, %v1970, 0.0
        %v2235 = vsel %vm2077, %v1971, 0.0
        %v2236 = vsel %vm2077, %v1972, 0.0
        %v2237 = vsel %vm2077, %v1973, 0.0
        %v2238 = vld [vmem:[#allocation2] sm:$0xff]
        %v2239 = vmax.f32 %v2078, %v2086
        %v2240 = vmax.f32 %v2239, %v2094
        %v2241 = vmax.f32 %v2240, %v2102
        %v2242 = vmax.f32 %v2241, %v2110
        %v2243 = vmax.f32 %v2242, %v2118
        %v2244 = vmax.f32 %v2243, %v2126
        %v2245 = vmax.f32 %v2244, %v2134
        %v2246 = vmax.f32 %v2245, %v2142
        %v2247 = vmax.f32 %v2246, %v2150
        %v2248 = vmax.f32 %v2247, %v2158
        %v2249 = vmax.f32 %v2248, %v2166
        %v2250 = vmax.f32 %v2249, %v2174
        %v2251 = vmax.f32 %v2250, %v2182
        %v2252 = vmax.f32 %v2251, %v2190
        %v2253 = vmax.f32 %v2252, %v2198
        %v2254 = vmax.f32 %v2253, %v2206
        %v2255 = vmax.f32 %v2254, %v2214
        %v2256 = vmax.f32 %v2255, %v2222
        %v2257 = vmax.f32 %v2256, %v2230
        %v2258 = vrot.slane %v2257, 4
        %v2259 = vmax.f32 %v2257, %v2258
        %v2260 = vrot.slane %v2259, 2
        %v2261 = vmax.f32 %v2259, %v2260
        %v2262 = vrot.slane %v2261, 1
        %v2263 = vmax.f32 %v2261, %v2262
        %v2264 = vmax.f32 %v2079, %v2087
        %v2265 = vmax.f32 %v2264, %v2095
        %v2266 = vmax.f32 %v2265, %v2103
        %v2267 = vmax.f32 %v2266, %v2111
        %v2268 = vmax.f32 %v2267, %v2119
        %v2269 = vmax.f32 %v2268, %v2127
        %v2270 = vmax.f32 %v2269, %v2135
        %v2271 = vmax.f32 %v2270, %v2143
        %v2272 = vmax.f32 %v2271, %v2151
        %v2273 = vmax.f32 %v2272, %v2159
        %v2274 = vmax.f32 %v2273, %v2167
        %v2275 = vmax.f32 %v2274, %v2175
        %v2276 = vmax.f32 %v2275, %v2183
        %v2277 = vmax.f32 %v2276, %v2191
        %v2278 = vmax.f32 %v2277, %v2199
        %v2279 = vmax.f32 %v2278, %v2207
        %v2280 = vmax.f32 %v2279, %v2215
        %v2281 = vmax.f32 %v2280, %v2223
        %v2282 = vmax.f32 %v2281, %v2231
        %v2283 = vrot.slane %v2282, 4
        %v2284 = vmax.f32 %v2282, %v2283
        %v2285 = vrot.slane %v2284, 2
        %v2286 = vmax.f32 %v2284, %v2285
        %v2287 = vrot.slane %v2286, 1
        %v2288 = vmax.f32 %v2286, %v2287
        %v2289 = vmax.f32 %v2080, %v2088
        %v2290 = vmax.f32 %v2289, %v2096
        %v2291 = vmax.f32 %v2290, %v2104
        %v2292 = vmax.f32 %v2291, %v2112
        %v2293 = vmax.f32 %v2292, %v2120
        %v2294 = vmax.f32 %v2293, %v2128
        %v2295 = vmax.f32 %v2294, %v2136
        %v2296 = vmax.f32 %v2295, %v2144
        %v2297 = vmax.f32 %v2296, %v2152
        %v2298 = vmax.f32 %v2297, %v2160
        %v2299 = vmax.f32 %v2298, %v2168
        %v2300 = vmax.f32 %v2299, %v2176
        %v2301 = vmax.f32 %v2300, %v2184
        %v2302 = vmax.f32 %v2301, %v2192
        %v2303 = vmax.f32 %v2302, %v2200
        %v2304 = vmax.f32 %v2303, %v2208
        %v2305 = vmax.f32 %v2304, %v2216
        %v2306 = vmax.f32 %v2305, %v2224
        %v2307 = vmax.f32 %v2306, %v2232
        %v2308 = vrot.slane %v2307, 4
        %v2309 = vmax.f32 %v2307, %v2308
        %v2310 = vrot.slane %v2309, 2
        %v2311 = vmax.f32 %v2309, %v2310
        %v2312 = vrot.slane %v2311, 1
        %v2313 = vmax.f32 %v2311, %v2312
        %v2314 = vmax.f32 %v2081, %v2089
        %v2315 = vmax.f32 %v2314, %v2097
        %v2316 = vmax.f32 %v2315, %v2105
        %v2317 = vmax.f32 %v2316, %v2113
        %v2318 = vmax.f32 %v2317, %v2121
        %v2319 = vmax.f32 %v2318, %v2129
        %v2320 = vmax.f32 %v2319, %v2137
        %v2321 = vmax.f32 %v2320, %v2145
        %v2322 = vmax.f32 %v2321, %v2153
        %v2323 = vmax.f32 %v2322, %v2161
        %v2324 = vmax.f32 %v2323, %v2169
        %v2325 = vmax.f32 %v2324, %v2177
        %v2326 = vmax.f32 %v2325, %v2185
        %v2327 = vmax.f32 %v2326, %v2193
        %v2328 = vmax.f32 %v2327, %v2201
        %v2329 = vmax.f32 %v2328, %v2209
        %v2330 = vmax.f32 %v2329, %v2217
        %v2331 = vmax.f32 %v2330, %v2225
        %v2332 = vmax.f32 %v2331, %v2233
        %v2333 = vrot.slane %v2332, 4
        %v2334 = vmax.f32 %v2332, %v2333
        %v2335 = vrot.slane %v2334, 2
        %v2336 = vmax.f32 %v2334, %v2335
        %v2337 = vrot.slane %v2336, 1
        %v2338 = vmax.f32 %v2336, %v2337
        %v2339 = vmax.f32 %v2082, %v2090
        %v2340 = vmax.f32 %v2339, %v2098
        %v2341 = vmax.f32 %v2340, %v2106
        %v2342 = vmax.f32 %v2341, %v2114
        %v2343 = vmax.f32 %v2342, %v2122
        %v2344 = vmax.f32 %v2343, %v2130
        %v2345 = vmax.f32 %v2344, %v2138
        %v2346 = vmax.f32 %v2345, %v2146
        %v2347 = vmax.f32 %v2346, %v2154
        %v2348 = vmax.f32 %v2347, %v2162
        %v2349 = vmax.f32 %v2348, %v2170
        %v2350 = vmax.f32 %v2349, %v2178
        %v2351 = vmax.f32 %v2350, %v2186
        %v2352 = vmax.f32 %v2351, %v2194
        %v2353 = vmax.f32 %v2352, %v2202
        %v2354 = vmax.f32 %v2353, %v2210
        %v2355 = vmax.f32 %v2354, %v2218
        %v2356 = vmax.f32 %v2355, %v2226
        %v2357 = vmax.f32 %v2356, %v2234
        %v2358 = vrot.slane %v2357, 4
        %v2359 = vmax.f32 %v2357, %v2358
        %v2360 = vrot.slane %v2359, 2
        %v2361 = vmax.f32 %v2359, %v2360
        %v2362 = vrot.slane %v2361, 1
        %v2363 = vmax.f32 %v2361, %v2362
        %v2364 = vmax.f32 %v2083, %v2091
        %v2365 = vmax.f32 %v2364, %v2099
        %v2366 = vmax.f32 %v2365, %v2107
        %v2367 = vmax.f32 %v2366, %v2115
        %v2368 = vmax.f32 %v2367, %v2123
        %v2369 = vmax.f32 %v2368, %v2131
        %v2370 = vmax.f32 %v2369, %v2139
        %v2371 = vmax.f32 %v2370, %v2147
        %v2372 = vmax.f32 %v2371, %v2155
        %v2373 = vmax.f32 %v2372, %v2163
        %v2374 = vmax.f32 %v2373, %v2171
        %v2375 = vmax.f32 %v2374, %v2179
        %v2376 = vmax.f32 %v2375, %v2187
        %v2377 = vmax.f32 %v2376, %v2195
        %v2378 = vmax.f32 %v2377, %v2203
        %v2379 = vmax.f32 %v2378, %v2211
        %v2380 = vmax.f32 %v2379, %v2219
        %v2381 = vmax.f32 %v2380, %v2227
        %v2382 = vmax.f32 %v2381, %v2235
        %v2383 = vrot.slane %v2382, 4
        %v2384 = vmax.f32 %v2382, %v2383
        %v2385 = vrot.slane %v2384, 2
        %v2386 = vmax.f32 %v2384, %v2385
        %v2387 = vrot.slane %v2386, 1
        %v2388 = vmax.f32 %v2386, %v2387
        %v2389 = vmax.f32 %v2084, %v2092
        %v2390 = vmax.f32 %v2389, %v2100
        %v2391 = vmax.f32 %v2390, %v2108
        %v2392 = vmax.f32 %v2391, %v2116
        %v2393 = vmax.f32 %v2392, %v2124
        %v2394 = vmax.f32 %v2393, %v2132
        %v2395 = vmax.f32 %v2394, %v2140
        %v2396 = vmax.f32 %v2395, %v2148
        %v2397 = vmax.f32 %v2396, %v2156
        %v2398 = vmax.f32 %v2397, %v2164
        %v2399 = vmax.f32 %v2398, %v2172
        %v2400 = vmax.f32 %v2399, %v2180
        %v2401 = vmax.f32 %v2400, %v2188
        %v2402 = vmax.f32 %v2401, %v2196
        %v2403 = vmax.f32 %v2402, %v2204
        %v2404 = vmax.f32 %v2403, %v2212
        %v2405 = vmax.f32 %v2404, %v2220
        %v2406 = vmax.f32 %v2405, %v2228
        %v2407 = vmax.f32 %v2406, %v2236
        %v2408 = vrot.slane %v2407, 4
        %v2409 = vmax.f32 %v2407, %v2408
        %v2410 = vrot.slane %v2409, 2
        %v2411 = vmax.f32 %v2409, %v2410
        %v2412 = vrot.slane %v2411, 1
        %v2413 = vmax.f32 %v2411, %v2412
        %v2414 = vmax.f32 %v2085, %v2093
        %v2415 = vmax.f32 %v2414, %v2101
        %v2416 = vmax.f32 %v2415, %v2109
        %v2417 = vmax.f32 %v2416, %v2117
        %v2418 = vmax.f32 %v2417, %v2125
        %v2419 = vmax.f32 %v2418, %v2133
        %v2420 = vmax.f32 %v2419, %v2141
        %v2421 = vmax.f32 %v2420, %v2149
        %v2422 = vmax.f32 %v2421, %v2157
        %v2423 = vmax.f32 %v2422, %v2165
        %v2424 = vmax.f32 %v2423, %v2173
        %v2425 = vmax.f32 %v2424, %v2181
        %v2426 = vmax.f32 %v2425, %v2189
        %v2427 = vmax.f32 %v2426, %v2197
        %v2428 = vmax.f32 %v2427, %v2205
        %v2429 = vmax.f32 %v2428, %v2213
        %v2430 = vmax.f32 %v2429, %v2221
        %v2431 = vmax.f32 %v2430, %v2229
        %v2432 = vmax.f32 %v2431, %v2237
        %v2433 = vrot.slane %v2432, 4
        %v2434 = vmax.f32 %v2432, %v2433
        %v2435 = vrot.slane %v2434, 2
        %v2436 = vmax.f32 %v2434, %v2435
        %v2437 = vrot.slane %v2436, 1
        %v2438 = vmax.f32 %v2436, %v2437
        %v2447 = vcombine.low %v2263, %v2288
        %v2448 = vcombine.low %v2313, %v2338
        %v2449 = vcombine.low %v2363, %v2388
        %v2450 = vcombine.low %v2413, %v2438
        %v2452 = vunpack.c.l.s4 1966171168
        %v2453 = vunpack.c.0.s8 %v2452
        %v2454 = vlaneseq
        %v2455 = vshrl.u32 %v2454, 7
        %v2456 = vsub.s32 %v2453, %v2455
        %v2457 = vrot.slane %v2447, %v2456
        %v2459 = vunpack.c.l.s4 1966171168
        %v2460 = vunpack.c.0.s8 %v2459
        %v2461 = vlaneseq
        %v2462 = vshrl.u32 %v2461, 7
        %v2463 = vsub.s32 %v2460, %v2462
        %v2464 = vrot.slane %v2448, %v2463
        %v2466 = vunpack.c.l.s4 1966171168
        %v2467 = vunpack.c.0.s8 %v2466
        %v2468 = vlaneseq
        %v2469 = vshrl.u32 %v2468, 7
        %v2470 = vsub.s32 %v2467, %v2469
        %v2471 = vrot.slane %v2449, %v2470
        %v2473 = vunpack.c.l.s4 1966171168
        %v2474 = vunpack.c.0.s8 %v2473
        %v2475 = vlaneseq
        %v2476 = vshrl.u32 %v2475, 7
        %v2477 = vsub.s32 %v2474, %v2476
        %v2478 = vrot.slane %v2450, %v2477
        %v2479 = vcombine.low %v2457, %v2464
        %v2480 = vcombine.low %v2471, %v2478
        %v2482 = vunpack.c.l.s4 1966171168
        %v2483 = vunpack.c.0.s8 %v2482
        %v2484 = vlaneseq
        %v2485 = vshrl.u32 %v2484, 7
        %v2486 = vsub.s32 %v2483, %v2485
        %v2487 = vrot.slane %v2479, %v2486
        %v2489 = vunpack.c.l.s4 1966171168
        %v2490 = vunpack.c.0.s8 %v2489
        %v2491 = vlaneseq
        %v2492 = vshrl.u32 %v2491, 7
        %v2493 = vsub.s32 %v2490, %v2492
        %v2494 = vrot.slane %v2480, %v2493
        %v2495 = vcombine.low %v2487, %v2494
        %v2497 = vmax.f32 %v2238, %v2495
        %2498 = vst [vmem:[#allocation2] sm:$0xff] %v2497
        // Predicated region
        $region61: #{tpu_custom_call.1} parent=47 // pred_check
          %p2499 = pneg %p356
        $region62: #{tpu_custom_call.1} parent=47 // pred_check_branch
          %2501 = sbr.rel (%p2499) target = $region64
        $region63: #{tpu_custom_call.1} parent=47 // pred_region
          %v2502 = vld [vmem:[#allocation2] sm:$0xff]
          %2503 = vst [vmem:[%s340] sm:$0xff] %v2502
        $region64: #{tpu_custom_call.1} parent=47 // pred_fallthru
          _
        %s2504 = sand.u32 %s210, 1
        %s2505 = scalar_lea.sflag [#allocation5], %s2504
        %s2506 = sand.u32 %s210, 1
        %s2507 = smul.addr %s2506, 8
        %s2508 = scalar_lea.vmem [#allocation8], %s2507
        // Predicated region
        $region65: #{tpu_custom_call.1} parent=47 // pred_check
          %p2509 = pneg %p220
        $region66: #{tpu_custom_call.1} parent=47 // pred_check_branch
          %2511 = sbr.rel (%p2509) target = $region68
        $region67: #{tpu_custom_call.1} parent=47 // pred_region
          %s2512 = smul.u32 %s28, 2
          %s2513 = sadd.s32 %s2512, %s29
          %s2515 = ssub.s32 128, 128
          %2516 = vsyncadd %s2505, %s2515
          %s2517 = smul.addr %s2513, 8
          %s2518 = smul.addr %s2517, 16
          %s2519 = scalar_lea.hbm %s7, %s2518
          %s2521 = sshll.u32 %s2508, 4
          %s2522 = int_to_ptr.vmem [resolvable:$true] %s2521
          %2524 = dma.vmem_to_hbm [thread:$0]  %s2522, 128, %s2519, %s2505
        $region68: #{tpu_custom_call.1} parent=47 // pred_fallthru
          _
      $region48: #{tpu_custom_call.1} parent=5 // pred_fallthru
        _
      %p2525 = scmp.le.s32.totalorder 2, %s18
      // Predicated region
      $region69: #{tpu_custom_call.1} parent=5 // pred_check
        %p2526 = pneg %p2525
      $region70: #{tpu_custom_call.1} parent=5 // pred_check_branch
        %2528 = sbr.rel (%p2526) target = $region72
      $region71: #{tpu_custom_call.1} parent=5 // pred_region
        %s2529 = ssub.s32 %s18, 2
        // Predicated region
        $region73: #{tpu_custom_call.1} parent=71 // pred_check
          %p2530 = pneg %p226
        $region74: #{tpu_custom_call.1} parent=71 // pred_check_branch
          %2532 = sbr.rel (%p2530) target = $region76
        $region75: #{tpu_custom_call.1} parent=71 // pred_region
          %s2533 = sand.u32 %s211, 1
          %s2534 = scalar_lea.sflag [#allocation5], %s2533
          %s2535 = sand.u32 %s211, 1
          %s2536 = smul.addr %s2535, 8
          %s2537 = scalar_lea.vmem [#allocation8], %s2536
          %2538 = dma.done %s2534, 128
        $region76: #{tpu_custom_call.1} parent=71 // pred_fallthru
          _
      $region72: #{tpu_custom_call.1} parent=5 // pred_fallthru
        _
    $region6: #{tpu_custom_call.1} parent=1 // loop_footer
      %s22 = sadd.s32 1, %s18
    $region7: #{tpu_custom_call.1} parent=1 // loop_footer_branch
      %17 = sbr.rel target = $region3
    $region8: #{tpu_custom_call.1} parent=1 // loop_exit
      _
    %2539 = vsyncpa [#allocation4], 1
    %s2540 = scalar_lea.sflag [#allocation4], 1
    %2541 = vsyncpa %s2540, 1
    %2542 = vsyncpa [#allocation7], 1
    %2543 = vsyncpa [#allocation5], 1
    %s2544 = scalar_lea.sflag [#allocation5], 1
    %2545 = vsyncpa %s2544, 1

</llo_original>
